<compile_context>
chip_gen: v7x
topology: tpu7x:2x2x1
jax: 0.10.0
libtpu: 0.0.40
codegen_flags: <defaults>
</compile_context>

<pallas_src>
import jax
import jax.numpy as jnp
from jax.experimental import pallas as pl
from jax.experimental.pallas import tpu as pltpu

Z_SIZE = 20
HIDDEN = 400
IMG_SIZE = 784

HIDDEN_PAD = 512   # 4 * 128
IMG_PAD = 896      # 7 * 128


def decoder_kernel(x_ref, w1_ref, b1_ref, w2_ref, b2_ref, o_ref):
    # fc1: Linear + ReLU (bf16 MXU matmul, f32 accumulate)
    x = x_ref[...].astype(w1_ref.dtype)
    h = jnp.dot(x, w1_ref[...], preferred_element_type=jnp.float32)
    h = jnp.maximum(h + b1_ref[...], 0.0)          # (TB, 512) + (1, 512)

    # fc2: Linear + Sigmoid
    y = jnp.dot(h.astype(w2_ref.dtype), w2_ref[...],
                preferred_element_type=jnp.float32)
    y = jax.nn.sigmoid(y + b2_ref[...])            # (TB, 896) + (1, 896)

    o_ref[...] = y.astype(o_ref.dtype)


def pack_params(w1, b1, w2, b2, weight_dtype=jnp.bfloat16):
    """Pad feature dims to lane-aligned sizes and cast weights for the MXU.

    w1: (Z_SIZE, HIDDEN), b1: (HIDDEN,), w2: (HIDDEN, IMG_SIZE), b2: (IMG_SIZE,)
    Padded rows/columns are zero, so the real 784 output columns are unchanged.
    Call once at init, not per forward pass.
    """
    w1p = jnp.pad(w1, ((0, 0), (0, HIDDEN_PAD - HIDDEN))).astype(weight_dtype)
    b1p = jnp.pad(b1.reshape(1, -1),
                  ((0, 0), (0, HIDDEN_PAD - HIDDEN))).astype(jnp.float32)
    w2p = jnp.pad(w2, ((0, HIDDEN_PAD - HIDDEN),
                       (0, IMG_PAD - IMG_SIZE))).astype(weight_dtype)
    b2p = jnp.pad(b2.reshape(1, -1),
                  ((0, 0), (0, IMG_PAD - IMG_SIZE))).astype(jnp.float32)
    return w1p, b1p, w2p, b2p


def decoder_forward(x, w1p, b1p, w2p, b2p, block_b=512):
    """x: (B, Z_SIZE) f32 -> (B, IMG_SIZE) f32. Params from pack_params."""
    B = x.shape[0]

    # Batch tile: multiple of 8 (sublane), capped at block_b (<=512 keeps the
    # f32 h intermediate and double-buffered out tiles well under VMEM limits).
    tb = min(block_b, B)
    tb = max(8, ((tb + 7) // 8) * 8)
    b_pad = pl.cdiv(B, tb) * tb
    if b_pad != B:
        x = jnp.pad(x, ((0, b_pad - B), (0, 0)))

    out = pl.pallas_call(
        decoder_kernel,
        out_shape=jax.ShapeDtypeStruct((b_pad, IMG_PAD), jnp.float32),
        grid_spec=pltpu.PrefetchScalarGridSpec(
            num_scalar_prefetch=0,
            grid=(b_pad // tb,),
            in_specs=[
                # x tile marches with the grid; weights use constant index
                # maps so they are fetched once and stay VMEM-resident.
                pl.BlockSpec((tb, Z_SIZE), lambda i: (i, 0)),
                pl.BlockSpec((Z_SIZE, HIDDEN_PAD), lambda i: (0, 0)),
                pl.BlockSpec((1, HIDDEN_PAD), lambda i: (0, 0)),
                pl.BlockSpec((HIDDEN_PAD, IMG_PAD), lambda i: (0, 0)),
                pl.BlockSpec((1, IMG_PAD), lambda i: (0, 0)),
            ],
            out_specs=pl.BlockSpec((tb, IMG_PAD), lambda i: (i, 0)),
        ),
        compiler_params=pltpu.CompilerParams(
            dimension_semantics=("parallel",),   # batch rows independent; lets
                                                 # v7x shard across its 2 TCs
        ),
    )(x, w1p, b1p, w2p, b2p)

    return out[:B, :IMG_SIZE]


def init_params(key):
    """Deterministic synthetic params matching nn.Linear(in, out) semantics.

    Stored as (in_features, out_features) so the kernel computes y = x @ W + b
    (identical to PyTorch's x @ W_pt.T + b with W = W_pt.T).
    """
    k1, k2, k3, k4 = jax.random.split(key, 4)
    s1 = 1.0 / jnp.sqrt(Z_SIZE)
    s2 = 1.0 / jnp.sqrt(HIDDEN)
    w1 = jax.random.uniform(k1, (Z_SIZE, HIDDEN), jnp.float32, -s1, s1)
    b1 = jax.random.uniform(k2, (HIDDEN,), jnp.float32, -s1, s1)
    w2 = jax.random.uniform(k3, (HIDDEN, IMG_SIZE), jnp.float32, -s2, s2)
    b2 = jax.random.uniform(k4, (IMG_SIZE,), jnp.float32, -s2, s2)
    return w1, b1, w2, b2


def decoder_ref_f32(x, w1, b1, w2, b2):
    """Pure f32 reference matching the PyTorch module exactly."""
    h = jnp.maximum(x @ w1 + b1, 0.0)
    return jax.nn.sigmoid(h @ w2 + b2)


def decoder_ref_packed(x, w1p, b1p, w2p, b2p):
    """Reference using the same padded/bf16 params as the kernel."""
    h = jnp.dot(x.astype(w1p.dtype), w1p, preferred_element_type=jnp.float32)
    h = jnp.maximum(h + b1p, 0.0)
    y = jnp.dot(h.astype(w2p.dtype), w2p, preferred_element_type=jnp.float32)
    return jax.nn.sigmoid(y + b2p)[:, :IMG_SIZE]


if __name__ == "__main__":
    key = jax.random.PRNGKey(0)
    kx, kx2, kp = jax.random.split(key, 3)

    w1, b1, w2, b2 = init_params(kp)
    packed = pack_params(w1, b1, w2, b2)

    # Case 1: small batch, single tile.
    B1 = 8
    x1 = jax.random.normal(kx, (B1, Z_SIZE), jnp.float32)
    out1 = jax.block_until_ready(decoder_forward(x1, *packed))
    assert out1.shape == (B1, IMG_SIZE)
    assert jnp.allclose(out1, decoder_ref_packed(x1, *packed),
                        atol=1e-4, rtol=1e-4)
    # bf16 weights vs. full-f32 module: loose tolerance on sigmoid outputs.
    assert jnp.allclose(out1, decoder_ref_f32(x1, w1, b1, w2, b2),
                        atol=5e-2, rtol=0.0)

    # Case 2: batch not a multiple of the tile -> exercises padding + multi-tile grid.
    B2 = 37
    x2 = jax.random.normal(kx2, (B2, Z_SIZE), jnp.float32)
    out2 = jax.block_until_ready(decoder_forward(x2, *packed, block_b=16))
    assert out2.shape == (B2, IMG_SIZE)
    assert jnp.allclose(out2, decoder_ref_packed(x2, *packed),
                        atol=1e-4, rtol=1e-4)
    assert jnp.allclose(out2, decoder_ref_f32(x2, w1, b1, w2, b2),
                        atol=5e-2, rtol=0.0)

    print("KERNEL_OK")
</pallas_src>

<mosaic_0001>
module attributes {stable_mosaic.version = 11 : i64} {
  func.func @decoder_kernel(%arg0: i32, %arg1: memref<8x20xf32, #tpu.memory_space<vmem>>, %arg2: memref<20x512xbf16, #tpu.memory_space<vmem>>, %arg3: memref<1x512xf32, #tpu.memory_space<vmem>>, %arg4: memref<512x896xbf16, #tpu.memory_space<vmem>>, %arg5: memref<1x896xf32, #tpu.memory_space<vmem>>, %arg6: memref<8x896xf32, #tpu.memory_space<vmem>>) attributes {dimension_semantics = [#tpu.dimension_semantics<parallel>], iteration_bounds = array<i64: 1>, scalar_prefetch = 0 : i64, scratch_operands = 0 : i64, tpu.core_type = #tpu.core_type<tc>, window_params = [{transform_indices = @transform_0, window_bounds = array<i64: 8, 20>}, {pipeline_mode = #tpu.pipeline_mode<synchronous>, transform_indices = @transform_1, window_bounds = array<i64: 20, 512>}, {pipeline_mode = #tpu.pipeline_mode<synchronous>, transform_indices = @transform_2, window_bounds = array<i64: 1, 512>}, {pipeline_mode = #tpu.pipeline_mode<synchronous>, transform_indices = @transform_3, window_bounds = array<i64: 512, 896>}, {pipeline_mode = #tpu.pipeline_mode<synchronous>, transform_indices = @transform_4, window_bounds = array<i64: 1, 896>}, {transform_indices = @transform_5, window_bounds = array<i64: 8, 896>}]} {
    %c0 = arith.constant 0 : index
    %c0_0 = arith.constant 0 : index
    %0 = vector.load %arg1[%c0, %c0_0] : memref<8x20xf32, #tpu.memory_space<vmem>>, vector<8x20xf32>
    %1 = arith.truncf %0 : vector<8x20xf32> to vector<8x20xbf16>
    %c0_1 = arith.constant 0 : index
    %c0_2 = arith.constant 0 : index
    %2 = vector.load %arg2[%c0_1, %c0_2] : memref<20x512xbf16, #tpu.memory_space<vmem>>, vector<20x512xbf16>
    %cst = arith.constant dense<0.000000e+00> : vector<8x512xf32>
    %3 = tpu.matmul %1, %2, %cst {dimension_numbers = #tpu.dot_dimension_numbers<[1], [0], [0], [1], [0, 0, 1, 1], [], []>} : vector<8x20xbf16>, vector<20x512xbf16>, vector<8x512xf32> -> vector<8x512xf32>
    %c0_3 = arith.constant 0 : index
    %c0_4 = arith.constant 0 : index
    %4 = vector.load %arg3[%c0_3, %c0_4] : memref<1x512xf32, #tpu.memory_space<vmem>>, vector<1x512xf32>
    %5 = vector.broadcast %4 : vector<1x512xf32> to vector<8x512xf32>
    %6 = arith.addf %3, %5 : vector<8x512xf32>
    %cst_5 = arith.constant 0.000000e+00 : f32
    %7 = vector.broadcast %cst_5 : f32 to vector<8x512xf32>
    %8 = arith.maximumf %6, %7 : vector<8x512xf32>
    %9 = arith.truncf %8 : vector<8x512xf32> to vector<8x512xbf16>
    %c0_6 = arith.constant 0 : index
    %c0_7 = arith.constant 0 : index
    %10 = vector.load %arg4[%c0_6, %c0_7] : memref<512x896xbf16, #tpu.memory_space<vmem>>, vector<512x896xbf16>
    %cst_8 = arith.constant dense<0.000000e+00> : vector<8x896xf32>
    %11 = tpu.matmul %9, %10, %cst_8 {dimension_numbers = #tpu.dot_dimension_numbers<[1], [0], [0], [1], [0, 0, 1, 1], [], []>} : vector<8x512xbf16>, vector<512x896xbf16>, vector<8x896xf32> -> vector<8x896xf32>
    %c0_9 = arith.constant 0 : index
    %c0_10 = arith.constant 0 : index
    %12 = vector.load %arg5[%c0_9, %c0_10] : memref<1x896xf32, #tpu.memory_space<vmem>>, vector<1x896xf32>
    %13 = vector.broadcast %12 : vector<1x896xf32> to vector<8x896xf32>
    %14 = arith.addf %11, %13 : vector<8x896xf32>
    %15 = arith.negf %14 : vector<8x896xf32>
    %16 = math.exp %15 : vector<8x896xf32>
    %cst_11 = arith.constant 1.000000e+00 : f32
    %17 = vector.broadcast %cst_11 : f32 to vector<8x896xf32>
    %18 = arith.addf %17, %16 : vector<8x896xf32>
    %19 = arith.divf %17, %18 : vector<8x896xf32>
    %c0_12 = arith.constant 0 : index
    %c0_13 = arith.constant 0 : index
    %20 = vector.load %arg6[%c0_12, %c0_13] : memref<8x896xf32, #tpu.memory_space<vmem>>, vector<8x896xf32>
    tpu.vector_store %arg6[%c0_12, %c0_13], %19 {strides = array<i32>} : memref<8x896xf32, #tpu.memory_space<vmem>>, vector<8x896xf32>,
    return
  }
  func.func @transform_0(%arg0: i32) -> (i32, i32) {
    %c0_i32 = arith.constant 0 : i32
    %c0_i32_0 = arith.constant 0 : i32
    return %arg0, %c0_i32 : i32, i32
  }
  func.func @transform_1(%arg0: i32) -> (i32, i32) {
    %c0_i32 = arith.constant 0 : i32
    %c0_i32_0 = arith.constant 0 : i32
    %c0_i32_1 = arith.constant 0 : i32
    return %c0_i32, %c0_i32_0 : i32, i32
  }
  func.func @transform_2(%arg0: i32) -> (i32, i32) {
    %c0_i32 = arith.constant 0 : i32
    %c0_i32_0 = arith.constant 0 : i32
    %c0_i32_1 = arith.constant 0 : i32
    return %c0_i32, %c0_i32_0 : i32, i32
  }
  func.func @transform_3(%arg0: i32) -> (i32, i32) {
    %c0_i32 = arith.constant 0 : i32
    %c0_i32_0 = arith.constant 0 : i32
    %c0_i32_1 = arith.constant 0 : i32
    return %c0_i32, %c0_i32_0 : i32, i32
  }
  func.func @transform_4(%arg0: i32) -> (i32, i32) {
    %c0_i32 = arith.constant 0 : i32
    %c0_i32_0 = arith.constant 0 : i32
    %c0_i32_1 = arith.constant 0 : i32
    return %c0_i32, %c0_i32_0 : i32, i32
  }
  func.func @transform_5(%arg0: i32) -> (i32, i32) {
    %c0_i32 = arith.constant 0 : i32
    %c0_i32_0 = arith.constant 0 : i32
    return %arg0, %c0_i32 : i32, i32
  }
}

</mosaic_0001>

<llo_original>
// kernel: tpu_custom_call.1
$region0: #{tpu_custom_call.1}
  #allocation0 [shape = 'u32[]', space=smem, size = 0x4, offset = 0x4, fixed_abs, tag = 'smem constant byte address 0x4 - core index']
  #allocation1 [shape = 'u32[144,128]{1,0:T(1,128)}', space=vmem, size = 0x12000, scoped, tag = 'internal scratch']
  %s0 = inlined_call_operand.hbm [shape: f32[8,20], index: 0, kind: input, shape index: {}]
  %s1 = inlined_call_operand.hbm [shape: bf16[20,512], index: 1, kind: input, shape index: {}]
  %s2 = inlined_call_operand.vmem [shape: f32[1,512], index: 2, kind: input, shape index: {}]
  %s3 = inlined_call_operand.hbm [shape: bf16[512,896], index: 3, kind: input, shape index: {}]
  %s4 = inlined_call_operand.vmem [shape: f32[1,896], index: 4, kind: input, shape index: {}]
  %s5 = inlined_call_operand.hbm [shape: f32[8,896], index: 5, kind: output, shape index: {}]
  %s6 = sld [smem:[#allocation0]]
  $region42: #{tpu_custom_call.1} parent=0
    _
  %s8 = ssub.s32 1, %s6
  %s9 = scalar_select 0, %s8, %s6
  $region1: #{tpu_custom_call.1} parent=0
    #allocation2 [shape = 'u8[4096]{0}', space=vmem, size = 0x1000, scoped, tag = 'input window, operand 0, single buffered']
    #allocation3 [shape = 's32[1]{0}', space=sflag, size = 0x4, scoped, tag = 'scoped memory for tpu_custom_call.1']
    #allocation4 [shape = 's32[1]{0}', space=sflag, size = 0x4, scoped, tag = 'scoped memory for tpu_custom_call.1']
    #allocation5 [shape = 'u8[24576]{0}', space=vmem, size = 0x6000, scoped, tag = 'input window, operand 1, single buffered']
    #allocation6 [shape = 's32[1]{0}', space=sflag, size = 0x4, scoped, tag = 'scoped memory for tpu_custom_call.1']
    #allocation7 [shape = 'u8[917504]{0}', space=vmem, size = 0xe0000, scoped, tag = 'input window, operand 3, single buffered']
    #allocation8 [shape = 'u8[28672]{0}', space=vmem, size = 0x7000, scoped, tag = 'output window, operand 0, single buffered']
    %10 = vsyncpa [#allocation3], 0
    %11 = vsyncpa [#allocation6], 0
    %12 = vsyncpa [#allocation4], 0
    // Predicated region
    $region2: #{tpu_custom_call.1} parent=1 // pred_check
      _
    $region3: #{tpu_custom_call.1} parent=1 // pred_check_branch
      %14 = sbr.rel (0) target = $region5
    $region4: #{tpu_custom_call.1} parent=1 // pred_region
      %s16 = ssub.s32 128, 128
      %17 = vsyncadd [#allocation3], %s16
      %s19 = sshll.u32 [#allocation2], 4
      %s20 = int_to_ptr.vmem [resolvable:$true] %s19
      %22 = dma.hbm_to_vmem [thread:$0]  %s0, 128, %s20, [#allocation3]
    $region5: #{tpu_custom_call.1} parent=1 // pred_fallthru
      _
    // Predicated region
    $region6: #{tpu_custom_call.1} parent=1 // pred_check
      _
    $region7: #{tpu_custom_call.1} parent=1 // pred_check_branch
      %24 = sbr.rel (0) target = $region9
    $region8: #{tpu_custom_call.1} parent=1 // pred_region
      %s26 = ssub.s32 768, 768
      %27 = vsyncadd [#allocation6], %s26
      %s28 = sshll.u32 [#allocation5], 4
      %s29 = int_to_ptr.vmem [resolvable:$true] %s28
      %34 = dma.hbm_to_vmem [thread:$0]  %s1, 768, %s29, [#allocation6], 256, 256, 16
    $region9: #{tpu_custom_call.1} parent=1 // pred_fallthru
      _
    // Predicated region
    $region10: #{tpu_custom_call.1} parent=1 // pred_check
      _
    $region11: #{tpu_custom_call.1} parent=1 // pred_check_branch
      %36 = sbr.rel (0) target = $region13
    $region12: #{tpu_custom_call.1} parent=1 // pred_region
      _
    $region13: #{tpu_custom_call.1} parent=1 // pred_fallthru
      _
    // Predicated region
    $region14: #{tpu_custom_call.1} parent=1 // pred_check
      _
    $region15: #{tpu_custom_call.1} parent=1 // pred_check_branch
      %38 = sbr.rel (0) target = $region17
    $region16: #{tpu_custom_call.1} parent=1 // pred_region
      %s40 = ssub.s32 28672, 28672
      %41 = vsyncadd [#allocation6], %s40
      %s42 = sshll.u32 [#allocation7], 4
      %s43 = int_to_ptr.vmem [resolvable:$true] %s42
      %48 = dma.hbm_to_vmem [thread:$0]  %s3, 28672, %s43, [#allocation6], 448, 448, 28
    $region17: #{tpu_custom_call.1} parent=1 // pred_fallthru
      _
    // Predicated region
    $region18: #{tpu_custom_call.1} parent=1 // pred_check
      _
    $region19: #{tpu_custom_call.1} parent=1 // pred_check_branch
      %50 = sbr.rel (0) target = $region21
    $region20: #{tpu_custom_call.1} parent=1 // pred_region
      _
    $region21: #{tpu_custom_call.1} parent=1 // pred_fallthru
      _
    // Predicated region
    $region22: #{tpu_custom_call.1} parent=1 // pred_check
      _
    $region23: #{tpu_custom_call.1} parent=1 // pred_check_branch
      %52 = sbr.rel (0) target = $region25
    $region24: #{tpu_custom_call.1} parent=1 // pred_region
      %53 = dma.done [#allocation3], 128
    $region25: #{tpu_custom_call.1} parent=1 // pred_fallthru
      _
    // Predicated region
    $region26: #{tpu_custom_call.1} parent=1 // pred_check
      _
    $region27: #{tpu_custom_call.1} parent=1 // pred_check_branch
      %55 = sbr.rel (0) target = $region29
    $region28: #{tpu_custom_call.1} parent=1 // pred_region
      %56 = dma.done [#allocation6], 768
    $region29: #{tpu_custom_call.1} parent=1 // pred_fallthru
      _
    // Predicated region
    $region30: #{tpu_custom_call.1} parent=1 // pred_check
      _
    $region31: #{tpu_custom_call.1} parent=1 // pred_check_branch
      %58 = sbr.rel (0) target = $region33
    $region32: #{tpu_custom_call.1} parent=1 // pred_region
      %59 = dma.done [#allocation6], 28672
    $region33: #{tpu_custom_call.1} parent=1 // pred_fallthru
      _
    %v61 = vld [vmem:[#allocation2] sm:$0xff]
    %v62 = vpack.c.bf16 %v61, %v61
    %v63 = vld [vmem:[#allocation5] sm:$0xff]
    %v64 = vld [vmem:[#allocation5 + $0x8] sm:$0xff]
    %v65 = vld [vmem:[#allocation5 + $0x10] sm:$0xff]
    %v66 = vld [vmem:[#allocation5 + $0x18] sm:$0xff]
    %v67 = vld [vmem:[#allocation5 + $0x20] sm:$0x33]
    %v68 = vld [vmem:[#allocation5 + $0x28] sm:$0x33]
    %v69 = vld [vmem:[%s2] sm:$0xf]
    %v71 = vlaneseq
    %v72 = vshrl.u32 %v71, 7
    %v73 = vsub.s32 0, %v72
    %v74 = vrot.slane %v69, %v73
    %v75 = vlaneseq
    %v76 = vshrl.u32 %v75, 7
    %v77 = vsub.s32 1, %v76
    %v78 = vrot.slane %v69, %v77
    %v79 = vlaneseq
    %v80 = vshrl.u32 %v79, 7
    %v81 = vsub.s32 2, %v80
    %v82 = vrot.slane %v69, %v81
    %v83 = vlaneseq
    %v84 = vshrl.u32 %v83, 7
    %v85 = vsub.s32 3, %v84
    %v86 = vrot.slane %v69, %v85
    %v97 = vunpack.c.l.b16 %v63
    %v98 = vunpack.c.h.b16 %v63
    %v99 = vunpack.c.l.b16 %v64
    %v100 = vunpack.c.h.b16 %v64
    %v101 = vunpack.c.l.b16 %v65
    %v102 = vunpack.c.h.b16 %v65
    %v103 = vunpack.c.l.b16 %v66
    %v104 = vunpack.c.h.b16 %v66
    %v105 = vunpack.c.l.b16 %v67
    %v106 = vunpack.c.h.b16 %v67
    %v107 = vunpack.c.l.b16 %v68
    %v108 = vunpack.c.h.b16 %v68
    %v109 = vpack.c.b16 %v101, %v97
    %v110 = vpack.c.b16 %v102, %v98
    %v111 = vpack.c.b16 %v103, %v99
    %v112 = vpack.c.b16 %v104, %v100
    %v113 = vpack.c.b16 %v105, %v105
    %v114 = vpack.c.b16 %v106, %v106
    %v115 = vpack.c.b16 %v107, %v107
    %v116 = vpack.c.b16 %v108, %v108
    %vm121 = vcmask 162816
    %v123 = vsel %vm121, %v62, 0
    %vm125 = vcmask 1041408
    %v127 = vsel %vm125, %v113, 0
    %v130 = vsel %vm125, %v114, 0
    %v133 = vsel %vm125, %v115, 0
    %v136 = vsel %vm125, %v116, 0
    %138 = vmatprep.subr.bf16.mxu0 %v110
    %139 = vmatpush1.bf16.msra.mxu0 %v109
    %140 = vmatprep.subr.bf16.mxu0 %v130
    %141 = vmatpush1.bf16.msra.mxu0 %v127
    %142 = vmatprep.subr.bf16.mxu0 0
    %143 = vmatpush1.bf16.msra.mxu0 0
    %144 = vmatprep.subr.bf16.mxu0 0
    %145 = vmatpush1.bf16.msra.mxu0 0
    %146 = vmatprep.subr.bf16.mxu0 0
    %147 = vmatpush1.bf16.msra.mxu0 0
    %148 = vmatprep.subr.bf16.mxu0 0
    %149 = vmatpush1.bf16.msra.mxu0 0
    %150 = vmatprep.subr.bf16.mxu0 0
    %151 = vmatpush1.bf16.msra.mxu0 0
    %152 = vmatprep.subr.bf16.mxu0 0
    %153 = vmatpush1.bf16.msra.mxu0 0
    %154 = vmatprep.subr.bf16.mxu0 0
    %155 = vmatpush1.bf16.msra.mxu0 0
    %156 = vmatprep.subr.bf16.mxu0 0
    %157 = vmatpush1.bf16.msra.mxu0 0
    %158 = vmatprep.subr.bf16.mxu0 0
    %159 = vmatpush1.bf16.msra.mxu0 0
    %160 = vmatprep.subr.bf16.mxu0 0
    %161 = vmatpush1.bf16.msra.mxu0 0
    %162 = vmatprep.subr.bf16.mxu0 0
    %163 = vmatpush1.bf16.msra.mxu0 0
    %164 = vmatprep.subr.bf16.mxu0 0
    %165 = vmatpush1.bf16.msra.mxu0 0
    %166 = vmatprep.subr.bf16.mxu0 0
    %167 = vmatpush1.bf16.msra.mxu0 0
    %168 = vmatprep.subr.bf16.mxu0 0
    %169 = vmatpush1.bf16.msra.mxu0 0
    %170 = vmatprep.mubr.bf16.mxu0 0
    %171 = vmatmul.mubr.bf16.gmra.mrb[0].mxu0 %v123
    %v172 = vpop.f32.mrb[0].mxu0
    %v173 = vadd.f32 %v74, %v172
    %v174 = vpop.f32.mrb[0].mxu0
    %v175 = vadd.f32 %v78, %v174
    %v176 = vpop.f32.mrb[0].mxu0
    %v177 = vpop.f32.mrb[0].mxu0
    %178 = vdwg.mxu0
    %179 = vmatprep.subr.bf16.mxu0 %v112
    %180 = vmatpush1.bf16.msra.mxu0 %v111
    %181 = vmatprep.subr.bf16.mxu0 %v136
    %182 = vmatpush1.bf16.msra.mxu0 %v133
    %183 = vmatprep.subr.bf16.mxu0 0
    %184 = vmatpush1.bf16.msra.mxu0 0
    %185 = vmatprep.subr.bf16.mxu0 0
    %186 = vmatpush1.bf16.msra.mxu0 0
    %187 = vmatprep.subr.bf16.mxu0 0
    %188 = vmatpush1.bf16.msra.mxu0 0
    %189 = vmatprep.subr.bf16.mxu0 0
    %190 = vmatpush1.bf16.msra.mxu0 0
    %191 = vmatprep.subr.bf16.mxu0 0
    %192 = vmatpush1.bf16.msra.mxu0 0
    %193 = vmatprep.subr.bf16.mxu0 0
    %194 = vmatpush1.bf16.msra.mxu0 0
    %195 = vmatprep.subr.bf16.mxu0 0
    %196 = vmatpush1.bf16.msra.mxu0 0
    %197 = vmatprep.subr.bf16.mxu0 0
    %198 = vmatpush1.bf16.msra.mxu0 0
    %199 = vmatprep.subr.bf16.mxu0 0
    %200 = vmatpush1.bf16.msra.mxu0 0
    %201 = vmatprep.subr.bf16.mxu0 0
    %202 = vmatpush1.bf16.msra.mxu0 0
    %203 = vmatprep.subr.bf16.mxu0 0
    %204 = vmatpush1.bf16.msra.mxu0 0
    %205 = vmatprep.subr.bf16.mxu0 0
    %206 = vmatpush1.bf16.msra.mxu0 0
    %207 = vmatprep.subr.bf16.mxu0 0
    %208 = vmatpush1.bf16.msra.mxu0 0
    %209 = vmatprep.subr.bf16.mxu0 0
    %210 = vmatpush1.bf16.msra.mxu0 0
    %211 = vmatprep.mubr.bf16.mxu0 0
    %212 = vmatmul.mubr.bf16.gmra.mrb[0].mxu0 %v123
    %v213 = vpop.f32.mrb[0].mxu0
    %v214 = vadd.f32 %v82, %v213
    %v215 = vpop.f32.mrb[0].mxu0
    %v216 = vadd.f32 %v86, %v215
    %v217 = vpop.f32.mrb[0].mxu0
    %v218 = vpop.f32.mrb[0].mxu0
    %219 = vdwg.mxu0
    %v220 = vmax.f32 %v173, 0.0
    %v221 = vmax.f32 %v175, 0.0
    %v222 = vmax.f32 %v214, 0.0
    %v223 = vmax.f32 %v216, 0.0
    %v224 = vpack.c.bf16 %v220, %v220
    %v225 = vpack.c.bf16 %v221, %v221
    %v226 = vpack.c.bf16 %v222, %v222
    %v227 = vpack.c.bf16 %v223, %v223
    %v228 = vld [vmem:[#allocation7] sm:$0xff]
    %v229 = vld [vmem:[#allocation7 + $0x8] sm:$0xff]
    %v230 = vld [vmem:[#allocation7 + $0x10] sm:$0xff]
    %v231 = vld [vmem:[#allocation7 + $0x18] sm:$0xf]
    %v232 = vld [vmem:[#allocation7 + $0x1c] sm:$0xff]
    %v233 = vld [vmem:[#allocation7 + $0x24] sm:$0xff]
    %v234 = vld [vmem:[#allocation7 + $0x2c] sm:$0xff]
    %v235 = vld [vmem:[#allocation7 + $0x34] sm:$0xf]
    %v236 = vld [vmem:[#allocation7 + $0x38] sm:$0xff]
    %v237 = vld [vmem:[#allocation7 + $0x40] sm:$0xff]
    %v238 = vld [vmem:[#allocation7 + $0x48] sm:$0xff]
    %v239 = vld [vmem:[#allocation7 + $0x50] sm:$0xf]
    %v240 = vld [vmem:[#allocation7 + $0x54] sm:$0xff]
    %v241 = vld [vmem:[#allocation7 + $0x5c] sm:$0xff]
    %v242 = vld [vmem:[#allocation7 + $0x64] sm:$0xff]
    %v243 = vld [vmem:[#allocation7 + $0x6c] sm:$0xf]
    %v244 = vld [vmem:[#allocation7 + $0x70] sm:$0xff]
    %v245 = vld [vmem:[#allocation7 + $0x78] sm:$0xff]
    %v246 = vld [vmem:[#allocation7 + $0x80] sm:$0xff]
    %v247 = vld [vmem:[#allocation7 + $0x88] sm:$0xf]
    %v248 = vld [vmem:[#allocation7 + $0x8c] sm:$0xff]
    %v249 = vld [vmem:[#allocation7 + $0x94] sm:$0xff]
    %v250 = vld [vmem:[#allocation7 + $0x9c] sm:$0xff]
    %v251 = vld [vmem:[#allocation7 + $0xa4] sm:$0xf]
    %v252 = vld [vmem:[#allocation7 + $0xa8] sm:$0xff]
    %v253 = vld [vmem:[#allocation7 + $0xb0] sm:$0xff]
    %v254 = vld [vmem:[#allocation7 + $0xb8] sm:$0xff]
    %v255 = vld [vmem:[#allocation7 + $0xc0] sm:$0xf]
    %v256 = vld [vmem:[#allocation7 + $0xc4] sm:$0xff]
    %v257 = vld [vmem:[#allocation7 + $0xcc] sm:$0xff]
    %v258 = vld [vmem:[#allocation7 + $0xd4] sm:$0xff]
    %v259 = vld [vmem:[#allocation7 + $0xdc] sm:$0xf]
    %v260 = vld [vmem:[#allocation7 + $0xe0] sm:$0xff]
    %v261 = vld [vmem:[#allocation7 + $0xe8] sm:$0xff]
    %v262 = vld [vmem:[#allocation7 + $0xf0] sm:$0xff]
    %v263 = vld [vmem:[#allocation7 + $0xf8] sm:$0xf]
    %v264 = vld [vmem:[#allocation7 + $0xfc] sm:$0xff]
    %v265 = vld [vmem:[#allocation7 + $0x104] sm:$0xff]
    %v266 = vld [vmem:[#allocation7 + $0x10c] sm:$0xff]
    %v267 = vld [vmem:[#allocation7 + $0x114] sm:$0xf]
    %v268 = vld [vmem:[#allocation7 + $0x118] sm:$0xff]
    %v269 = vld [vmem:[#allocation7 + $0x120] sm:$0xff]
    %v270 = vld [vmem:[#allocation7 + $0x128] sm:$0xff]
    %v271 = vld [vmem:[#allocation7 + $0x130] sm:$0xf]
    %v272 = vld [vmem:[#allocation7 + $0x134] sm:$0xff]
    %v273 = vld [vmem:[#allocation7 + $0x13c] sm:$0xff]
    %v274 = vld [vmem:[#allocation7 + $0x144] sm:$0xff]
    %v275 = vld [vmem:[#allocation7 + $0x14c] sm:$0xf]
    %v276 = vld [vmem:[#allocation7 + $0x150] sm:$0xff]
    %v277 = vld [vmem:[#allocation7 + $0x158] sm:$0xff]
    %v278 = vld [vmem:[#allocation7 + $0x160] sm:$0xff]
    %v279 = vld [vmem:[#allocation7 + $0x168] sm:$0xf]
    %v280 = vld [vmem:[#allocation7 + $0x16c] sm:$0xff]
    %v281 = vld [vmem:[#allocation7 + $0x174] sm:$0xff]
    %v282 = vld [vmem:[#allocation7 + $0x17c] sm:$0xff]
    %v283 = vld [vmem:[#allocation7 + $0x184] sm:$0xf]
    %v284 = vld [vmem:[#allocation7 + $0x188] sm:$0xff]
    %v285 = vld [vmem:[#allocation7 + $0x190] sm:$0xff]
    %v286 = vld [vmem:[#allocation7 + $0x198] sm:$0xff]
    %v287 = vld [vmem:[#allocation7 + $0x1a0] sm:$0xf]
    %v288 = vld [vmem:[#allocation7 + $0x1a4] sm:$0xff]
    %v289 = vld [vmem:[#allocation7 + $0x1ac] sm:$0xff]
    %v290 = vld [vmem:[#allocation7 + $0x1b4] sm:$0xff]
    %v291 = vld [vmem:[#allocation7 + $0x1bc] sm:$0xf]
    %v292 = vld [vmem:[#allocation7 + $0x1c0] sm:$0xff]
    %v293 = vld [vmem:[#allocation7 + $0x1c8] sm:$0xff]
    %v294 = vld [vmem:[#allocation7 + $0x1d0] sm:$0xff]
    %v295 = vld [vmem:[#allocation7 + $0x1d8] sm:$0xf]
    %v296 = vld [vmem:[#allocation7 + $0x1dc] sm:$0xff]
    %v297 = vld [vmem:[#allocation7 + $0x1e4] sm:$0xff]
    %v298 = vld [vmem:[#allocation7 + $0x1ec] sm:$0xff]
    %v299 = vld [vmem:[#allocation7 + $0x1f4] sm:$0xf]
    %v300 = vld [vmem:[#allocation7 + $0x1f8] sm:$0xff]
    %v301 = vld [vmem:[#allocation7 + $0x200] sm:$0xff]
    %v302 = vld [vmem:[#allocation7 + $0x208] sm:$0xff]
    %v303 = vld [vmem:[#allocation7 + $0x210] sm:$0xf]
    %v304 = vld [vmem:[#allocation7 + $0x214] sm:$0xff]
    %v305 = vld [vmem:[#allocation7 + $0x21c] sm:$0xff]
    %v306 = vld [vmem:[#allocation7 + $0x224] sm:$0xff]
    %v307 = vld [vmem:[#allocation7 + $0x22c] sm:$0xf]
    %v308 = vld [vmem:[#allocation7 + $0x230] sm:$0xff]
    %v309 = vld [vmem:[#allocation7 + $0x238] sm:$0xff]
    %v310 = vld [vmem:[#allocation7 + $0x240] sm:$0xff]
    %v311 = vld [vmem:[#allocation7 + $0x248] sm:$0xf]
    %v312 = vld [vmem:[#allocation7 + $0x24c] sm:$0xff]
    %v313 = vld [vmem:[#allocation7 + $0x254] sm:$0xff]
    %v314 = vld [vmem:[#allocation7 + $0x25c] sm:$0xff]
    %v315 = vld [vmem:[#allocation7 + $0x264] sm:$0xf]
    %v316 = vld [vmem:[#allocation7 + $0x268] sm:$0xff]
    %v317 = vld [vmem:[#allocation7 + $0x270] sm:$0xff]
    %v318 = vld [vmem:[#allocation7 + $0x278] sm:$0xff]
    %v319 = vld [vmem:[#allocation7 + $0x280] sm:$0xf]
    %v320 = vld [vmem:[#allocation7 + $0x284] sm:$0xff]
    %v321 = vld [vmem:[#allocation7 + $0x28c] sm:$0xff]
    %v322 = vld [vmem:[#allocation7 + $0x294] sm:$0xff]
    %v323 = vld [vmem:[#allocation7 + $0x29c] sm:$0xf]
    %v324 = vld [vmem:[#allocation7 + $0x2a0] sm:$0xff]
    %v325 = vld [vmem:[#allocation7 + $0x2a8] sm:$0xff]
    %v326 = vld [vmem:[#allocation7 + $0x2b0] sm:$0xff]
    %v327 = vld [vmem:[#allocation7 + $0x2b8] sm:$0xf]
    %v328 = vld [vmem:[#allocation7 + $0x2bc] sm:$0xff]
    %v329 = vld [vmem:[#allocation7 + $0x2c4] sm:$0xff]
    %v330 = vld [vmem:[#allocation7 + $0x2cc] sm:$0xff]
    %v331 = vld [vmem:[#allocation7 + $0x2d4] sm:$0xf]
    %v332 = vld [vmem:[#allocation7 + $0x2d8] sm:$0xff]
    %v333 = vld [vmem:[#allocation7 + $0x2e0] sm:$0xff]
    %v334 = vld [vmem:[#allocation7 + $0x2e8] sm:$0xff]
    %v335 = vld [vmem:[#allocation7 + $0x2f0] sm:$0xf]
    %v336 = vld [vmem:[#allocation7 + $0x2f4] sm:$0xff]
    %v337 = vld [vmem:[#allocation7 + $0x2fc] sm:$0xff]
    %v338 = vld [vmem:[#allocation7 + $0x304] sm:$0xff]
    %v339 = vld [vmem:[#allocation7 + $0x30c] sm:$0xf]
    %v340 = vld [vmem:[#allocation7 + $0x310] sm:$0xff]
    %v341 = vld [vmem:[#allocation7 + $0x318] sm:$0xff]
    %v342 = vld [vmem:[#allocation7 + $0x320] sm:$0xff]
    %v343 = vld [vmem:[#allocation7 + $0x328] sm:$0xf]
    %v344 = vld [vmem:[#allocation7 + $0x32c] sm:$0xff]
    %v345 = vld [vmem:[#allocation7 + $0x334] sm:$0xff]
    %v346 = vld [vmem:[#allocation7 + $0x33c] sm:$0xff]
    %v347 = vld [vmem:[#allocation7 + $0x344] sm:$0xf]
    %v348 = vld [vmem:[#allocation7 + $0x348] sm:$0xff]
    %v349 = vld [vmem:[#allocation7 + $0x350] sm:$0xff]
    %v350 = vld [vmem:[#allocation7 + $0x358] sm:$0xff]
    %v351 = vld [vmem:[#allocation7 + $0x360] sm:$0xf]
    %v352 = vld [vmem:[#allocation7 + $0x364] sm:$0xff]
    %v353 = vld [vmem:[#allocation7 + $0x36c] sm:$0xff]
    %v354 = vld [vmem:[#allocation7 + $0x374] sm:$0xff]
    %v355 = vld [vmem:[#allocation7 + $0x37c] sm:$0xf]
    %v356 = vld [vmem:[#allocation7 + $0x380] sm:$0xff]
    %v357 = vld [vmem:[#allocation7 + $0x388] sm:$0xff]
    %v358 = vld [vmem:[#allocation7 + $0x390] sm:$0xff]
    %v359 = vld [vmem:[#allocation7 + $0x398] sm:$0xf]
    %v360 = vld [vmem:[#allocation7 + $0x39c] sm:$0xff]
    %v361 = vld [vmem:[#allocation7 + $0x3a4] sm:$0xff]
    %v362 = vld [vmem:[#allocation7 + $0x3ac] sm:$0xff]
    %v363 = vld [vmem:[#allocation7 + $0x3b4] sm:$0xf]
    %v364 = vld [vmem:[#allocation7 + $0x3b8] sm:$0xff]
    %v365 = vld [vmem:[#allocation7 + $0x3c0] sm:$0xff]
    %v366 = vld [vmem:[#allocation7 + $0x3c8] sm:$0xff]
    %v367 = vld [vmem:[#allocation7 + $0x3d0] sm:$0xf]
    %v368 = vld [vmem:[#allocation7 + $0x3d4] sm:$0xff]
    %v369 = vld [vmem:[#allocation7 + $0x3dc] sm:$0xff]
    %v370 = vld [vmem:[#allocation7 + $0x3e4] sm:$0xff]
    %v371 = vld [vmem:[#allocation7 + $0x3ec] sm:$0xf]
    %v372 = vld [vmem:[#allocation7 + $0x3f0] sm:$0xff]
    %v373 = vld [vmem:[#allocation7 + $0x3f8] sm:$0xff]
    %v374 = vld [vmem:[#allocation7 + $0x400] sm:$0xff]
    %v375 = vld [vmem:[#allocation7 + $0x408] sm:$0xf]
    %v376 = vld [vmem:[#allocation7 + $0x40c] sm:$0xff]
    %v377 = vld [vmem:[#allocation7 + $0x414] sm:$0xff]
    %v378 = vld [vmem:[#allocation7 + $0x41c] sm:$0xff]
    %v379 = vld [vmem:[#allocation7 + $0x424] sm:$0xf]
    %v380 = vld [vmem:[#allocation7 + $0x428] sm:$0xff]
    %v381 = vld [vmem:[#allocation7 + $0x430] sm:$0xff]
    %v382 = vld [vmem:[#allocation7 + $0x438] sm:$0xff]
    %v383 = vld [vmem:[#allocation7 + $0x440] sm:$0xf]
    %v384 = vld [vmem:[#allocation7 + $0x444] sm:$0xff]
    %v385 = vld [vmem:[#allocation7 + $0x44c] sm:$0xff]
    %v386 = vld [vmem:[#allocation7 + $0x454] sm:$0xff]
    %v387 = vld [vmem:[#allocation7 + $0x45c] sm:$0xf]
    %v388 = vld [vmem:[#allocation7 + $0x460] sm:$0xff]
    %v389 = vld [vmem:[#allocation7 + $0x468] sm:$0xff]
    %v390 = vld [vmem:[#allocation7 + $0x470] sm:$0xff]
    %v391 = vld [vmem:[#allocation7 + $0x478] sm:$0xf]
    %v392 = vld [vmem:[#allocation7 + $0x47c] sm:$0xff]
    %v393 = vld [vmem:[#allocation7 + $0x484] sm:$0xff]
    %v394 = vld [vmem:[#allocation7 + $0x48c] sm:$0xff]
    %v395 = vld [vmem:[#allocation7 + $0x494] sm:$0xf]
    %v396 = vld [vmem:[#allocation7 + $0x498] sm:$0xff]
    %v397 = vld [vmem:[#allocation7 + $0x4a0] sm:$0xff]
    %v398 = vld [vmem:[#allocation7 + $0x4a8] sm:$0xff]
    %v399 = vld [vmem:[#allocation7 + $0x4b0] sm:$0xf]
    %v400 = vld [vmem:[#allocation7 + $0x4b4] sm:$0xff]
    %v401 = vld [vmem:[#allocation7 + $0x4bc] sm:$0xff]
    %v402 = vld [vmem:[#allocation7 + $0x4c4] sm:$0xff]
    %v403 = vld [vmem:[#allocation7 + $0x4cc] sm:$0xf]
    %v404 = vld [vmem:[#allocation7 + $0x4d0] sm:$0xff]
    %v405 = vld [vmem:[#allocation7 + $0x4d8] sm:$0xff]
    %v406 = vld [vmem:[#allocation7 + $0x4e0] sm:$0xff]
    %v407 = vld [vmem:[#allocation7 + $0x4e8] sm:$0xf]
    %v408 = vld [vmem:[#allocation7 + $0x4ec] sm:$0xff]
    %v409 = vld [vmem:[#allocation7 + $0x4f4] sm:$0xff]
    %v410 = vld [vmem:[#allocation7 + $0x4fc] sm:$0xff]
    %v411 = vld [vmem:[#allocation7 + $0x504] sm:$0xf]
    %v412 = vld [vmem:[#allocation7 + $0x508] sm:$0xff]
    %v413 = vld [vmem:[#allocation7 + $0x510] sm:$0xff]
    %v414 = vld [vmem:[#allocation7 + $0x518] sm:$0xff]
    %v415 = vld [vmem:[#allocation7 + $0x520] sm:$0xf]
    %v416 = vld [vmem:[#allocation7 + $0x524] sm:$0xff]
    %v417 = vld [vmem:[#allocation7 + $0x52c] sm:$0xff]
    %v418 = vld [vmem:[#allocation7 + $0x534] sm:$0xff]
    %v419 = vld [vmem:[#allocation7 + $0x53c] sm:$0xf]
    %v420 = vld [vmem:[#allocation7 + $0x540] sm:$0xff]
    %v421 = vld [vmem:[#allocation7 + $0x548] sm:$0xff]
    %v422 = vld [vmem:[#allocation7 + $0x550] sm:$0xff]
    %v423 = vld [vmem:[#allocation7 + $0x558] sm:$0xf]
    %v424 = vld [vmem:[#allocation7 + $0x55c] sm:$0xff]
    %v425 = vld [vmem:[#allocation7 + $0x564] sm:$0xff]
    %v426 = vld [vmem:[#allocation7 + $0x56c] sm:$0xff]
    %v427 = vld [vmem:[#allocation7 + $0x574] sm:$0xf]
    %v428 = vld [vmem:[#allocation7 + $0x578] sm:$0xff]
    %v429 = vld [vmem:[#allocation7 + $0x580] sm:$0xff]
    %v430 = vld [vmem:[#allocation7 + $0x588] sm:$0xff]
    %v431 = vld [vmem:[#allocation7 + $0x590] sm:$0xf]
    %v432 = vld [vmem:[#allocation7 + $0x594] sm:$0xff]
    %v433 = vld [vmem:[#allocation7 + $0x59c] sm:$0xff]
    %v434 = vld [vmem:[#allocation7 + $0x5a4] sm:$0xff]
    %v435 = vld [vmem:[#allocation7 + $0x5ac] sm:$0xf]
    %v436 = vld [vmem:[#allocation7 + $0x5b0] sm:$0xff]
    %v437 = vld [vmem:[#allocation7 + $0x5b8] sm:$0xff]
    %v438 = vld [vmem:[#allocation7 + $0x5c0] sm:$0xff]
    %v439 = vld [vmem:[#allocation7 + $0x5c8] sm:$0xf]
    %v440 = vld [vmem:[#allocation7 + $0x5cc] sm:$0xff]
    %v441 = vld [vmem:[#allocation7 + $0x5d4] sm:$0xff]
    %v442 = vld [vmem:[#allocation7 + $0x5dc] sm:$0xff]
    %v443 = vld [vmem:[#allocation7 + $0x5e4] sm:$0xf]
    %v444 = vld [vmem:[#allocation7 + $0x5e8] sm:$0xff]
    %v445 = vld [vmem:[#allocation7 + $0x5f0] sm:$0xff]
    %v446 = vld [vmem:[#allocation7 + $0x5f8] sm:$0xff]
    %v447 = vld [vmem:[#allocation7 + $0x600] sm:$0xf]
    %v448 = vld [vmem:[#allocation7 + $0x604] sm:$0xff]
    %v449 = vld [vmem:[#allocation7 + $0x60c] sm:$0xff]
    %v450 = vld [vmem:[#allocation7 + $0x614] sm:$0xff]
    %v451 = vld [vmem:[#allocation7 + $0x61c] sm:$0xf]
    %v452 = vld [vmem:[#allocation7 + $0x620] sm:$0xff]
    %v453 = vld [vmem:[#allocation7 + $0x628] sm:$0xff]
    %v454 = vld [vmem:[#allocation7 + $0x630] sm:$0xff]
    %v455 = vld [vmem:[#allocation7 + $0x638] sm:$0xf]
    %v456 = vld [vmem:[#allocation7 + $0x63c] sm:$0xff]
    %v457 = vld [vmem:[#allocation7 + $0x644] sm:$0xff]
    %v458 = vld [vmem:[#allocation7 + $0x64c] sm:$0xff]
    %v459 = vld [vmem:[#allocation7 + $0x654] sm:$0xf]
    %v460 = vld [vmem:[#allocation7 + $0x658] sm:$0xff]
    %v461 = vld [vmem:[#allocation7 + $0x660] sm:$0xff]
    %v462 = vld [vmem:[#allocation7 + $0x668] sm:$0xff]
    %v463 = vld [vmem:[#allocation7 + $0x670] sm:$0xf]
    %v464 = vld [vmem:[#allocation7 + $0x674] sm:$0xff]
    %v465 = vld [vmem:[#allocation7 + $0x67c] sm:$0xff]
    %v466 = vld [vmem:[#allocation7 + $0x684] sm:$0xff]
    %v467 = vld [vmem:[#allocation7 + $0x68c] sm:$0xf]
    %v468 = vld [vmem:[#allocation7 + $0x690] sm:$0xff]
    %v469 = vld [vmem:[#allocation7 + $0x698] sm:$0xff]
    %v470 = vld [vmem:[#allocation7 + $0x6a0] sm:$0xff]
    %v471 = vld [vmem:[#allocation7 + $0x6a8] sm:$0xf]
    %v472 = vld [vmem:[#allocation7 + $0x6ac] sm:$0xff]
    %v473 = vld [vmem:[#allocation7 + $0x6b4] sm:$0xff]
    %v474 = vld [vmem:[#allocation7 + $0x6bc] sm:$0xff]
    %v475 = vld [vmem:[#allocation7 + $0x6c4] sm:$0xf]
    %v476 = vld [vmem:[#allocation7 + $0x6c8] sm:$0xff]
    %v477 = vld [vmem:[#allocation7 + $0x6d0] sm:$0xff]
    %v478 = vld [vmem:[#allocation7 + $0x6d8] sm:$0xff]
    %v479 = vld [vmem:[#allocation7 + $0x6e0] sm:$0xf]
    %v480 = vld [vmem:[#allocation7 + $0x6e4] sm:$0xff]
    %v481 = vld [vmem:[#allocation7 + $0x6ec] sm:$0xff]
    %v482 = vld [vmem:[#allocation7 + $0x6f4] sm:$0xff]
    %v483 = vld [vmem:[#allocation7 + $0x6fc] sm:$0xf]
    %v484 = vld [vmem:[%s4] sm:$0xff]
    %v486 = vlaneseq
    %v487 = vshrl.u32 %v486, 7
    %v488 = vsub.s32 0, %v487
    %v489 = vrot.slane %v484, %v488
    %v490 = vlaneseq
    %v491 = vshrl.u32 %v490, 7
    %v492 = vsub.s32 1, %v491
    %v493 = vrot.slane %v484, %v492
    %v494 = vlaneseq
    %v495 = vshrl.u32 %v494, 7
    %v496 = vsub.s32 2, %v495
    %v497 = vrot.slane %v484, %v496
    %v498 = vlaneseq
    %v499 = vshrl.u32 %v498, 7
    %v500 = vsub.s32 3, %v499
    %v501 = vrot.slane %v484, %v500
    %v502 = vlaneseq
    %v503 = vshrl.u32 %v502, 7
    %v504 = vsub.s32 4, %v503
    %v505 = vrot.slane %v484, %v504
    %v506 = vlaneseq
    %v507 = vshrl.u32 %v506, 7
    %v508 = vsub.s32 5, %v507
    %v509 = vrot.slane %v484, %v508
    %v510 = vlaneseq
    %v511 = vshrl.u32 %v510, 7
    %v512 = vsub.s32 6, %v511
    %v513 = vrot.slane %v484, %v512
    %v777 = vunpack.c.l.b16 %v228
    %v778 = vunpack.c.h.b16 %v228
    %v779 = vunpack.c.l.b16 %v229
    %v780 = vunpack.c.h.b16 %v229
    %v781 = vunpack.c.l.b16 %v230
    %v782 = vunpack.c.h.b16 %v230
    %v783 = vunpack.c.l.b16 %v231
    %v784 = vunpack.c.l.b16 %v232
    %v785 = vunpack.c.h.b16 %v232
    %v786 = vunpack.c.l.b16 %v233
    %v787 = vunpack.c.h.b16 %v233
    %v788 = vunpack.c.l.b16 %v234
    %v789 = vunpack.c.h.b16 %v234
    %v790 = vunpack.c.l.b16 %v235
    %v791 = vunpack.c.l.b16 %v236
    %v792 = vunpack.c.h.b16 %v236
    %v793 = vunpack.c.l.b16 %v237
    %v794 = vunpack.c.h.b16 %v237
    %v795 = vunpack.c.l.b16 %v238
    %v796 = vunpack.c.h.b16 %v238
    %v797 = vunpack.c.l.b16 %v239
    %v798 = vunpack.c.l.b16 %v240
    %v799 = vunpack.c.h.b16 %v240
    %v800 = vunpack.c.l.b16 %v241
    %v801 = vunpack.c.h.b16 %v241
    %v802 = vunpack.c.l.b16 %v242
    %v803 = vunpack.c.h.b16 %v242
    %v804 = vunpack.c.l.b16 %v243
    %v805 = vunpack.c.l.b16 %v244
    %v806 = vunpack.c.h.b16 %v244
    %v807 = vunpack.c.l.b16 %v245
    %v808 = vunpack.c.h.b16 %v245
    %v809 = vunpack.c.l.b16 %v246
    %v810 = vunpack.c.h.b16 %v246
    %v811 = vunpack.c.l.b16 %v247
    %v812 = vunpack.c.l.b16 %v248
    %v813 = vunpack.c.h.b16 %v248
    %v814 = vunpack.c.l.b16 %v249
    %v815 = vunpack.c.h.b16 %v249
    %v816 = vunpack.c.l.b16 %v250
    %v817 = vunpack.c.h.b16 %v250
    %v818 = vunpack.c.l.b16 %v251
    %v819 = vunpack.c.l.b16 %v252
    %v820 = vunpack.c.h.b16 %v252
    %v821 = vunpack.c.l.b16 %v253
    %v822 = vunpack.c.h.b16 %v253
    %v823 = vunpack.c.l.b16 %v254
    %v824 = vunpack.c.h.b16 %v254
    %v825 = vunpack.c.l.b16 %v255
    %v826 = vunpack.c.l.b16 %v256
    %v827 = vunpack.c.h.b16 %v256
    %v828 = vunpack.c.l.b16 %v257
    %v829 = vunpack.c.h.b16 %v257
    %v830 = vunpack.c.l.b16 %v258
    %v831 = vunpack.c.h.b16 %v258
    %v832 = vunpack.c.l.b16 %v259
    %v833 = vunpack.c.l.b16 %v260
    %v834 = vunpack.c.h.b16 %v260
    %v835 = vunpack.c.l.b16 %v261
    %v836 = vunpack.c.h.b16 %v261
    %v837 = vunpack.c.l.b16 %v262
    %v838 = vunpack.c.h.b16 %v262
    %v839 = vunpack.c.l.b16 %v263
    %v840 = vunpack.c.l.b16 %v264
    %v841 = vunpack.c.h.b16 %v264
    %v842 = vunpack.c.l.b16 %v265
    %v843 = vunpack.c.h.b16 %v265
    %v844 = vunpack.c.l.b16 %v266
    %v845 = vunpack.c.h.b16 %v266
    %v846 = vunpack.c.l.b16 %v267
    %v847 = vunpack.c.l.b16 %v268
    %v848 = vunpack.c.h.b16 %v268
    %v849 = vunpack.c.l.b16 %v269
    %v850 = vunpack.c.h.b16 %v269
    %v851 = vunpack.c.l.b16 %v270
    %v852 = vunpack.c.h.b16 %v270
    %v853 = vunpack.c.l.b16 %v271
    %v854 = vunpack.c.l.b16 %v272
    %v855 = vunpack.c.h.b16 %v272
    %v856 = vunpack.c.l.b16 %v273
    %v857 = vunpack.c.h.b16 %v273
    %v858 = vunpack.c.l.b16 %v274
    %v859 = vunpack.c.h.b16 %v274
    %v860 = vunpack.c.l.b16 %v275
    %v861 = vunpack.c.l.b16 %v276
    %v862 = vunpack.c.h.b16 %v276
    %v863 = vunpack.c.l.b16 %v277
    %v864 = vunpack.c.h.b16 %v277
    %v865 = vunpack.c.l.b16 %v278
    %v866 = vunpack.c.h.b16 %v278
    %v867 = vunpack.c.l.b16 %v279
    %v868 = vunpack.c.l.b16 %v280
    %v869 = vunpack.c.h.b16 %v280
    %v870 = vunpack.c.l.b16 %v281
    %v871 = vunpack.c.h.b16 %v281
    %v872 = vunpack.c.l.b16 %v282
    %v873 = vunpack.c.h.b16 %v282
    %v874 = vunpack.c.l.b16 %v283
    %v875 = vunpack.c.l.b16 %v284
    %v876 = vunpack.c.h.b16 %v284
    %v877 = vunpack.c.l.b16 %v285
    %v878 = vunpack.c.h.b16 %v285
    %v879 = vunpack.c.l.b16 %v286
    %v880 = vunpack.c.h.b16 %v286
    %v881 = vunpack.c.l.b16 %v287
    %v882 = vunpack.c.l.b16 %v288
    %v883 = vunpack.c.h.b16 %v288
    %v884 = vunpack.c.l.b16 %v289
    %v885 = vunpack.c.h.b16 %v289
    %v886 = vunpack.c.l.b16 %v290
    %v887 = vunpack.c.h.b16 %v290
    %v888 = vunpack.c.l.b16 %v291
    %v889 = vunpack.c.l.b16 %v292
    %v890 = vunpack.c.h.b16 %v292
    %v891 = vunpack.c.l.b16 %v293
    %v892 = vunpack.c.h.b16 %v293
    %v893 = vunpack.c.l.b16 %v294
    %v894 = vunpack.c.h.b16 %v294
    %v895 = vunpack.c.l.b16 %v295
    %v896 = vunpack.c.l.b16 %v296
    %v897 = vunpack.c.h.b16 %v296
    %v898 = vunpack.c.l.b16 %v297
    %v899 = vunpack.c.h.b16 %v297
    %v900 = vunpack.c.l.b16 %v298
    %v901 = vunpack.c.h.b16 %v298
    %v902 = vunpack.c.l.b16 %v299
    %v903 = vunpack.c.l.b16 %v300
    %v904 = vunpack.c.h.b16 %v300
    %v905 = vunpack.c.l.b16 %v301
    %v906 = vunpack.c.h.b16 %v301
    %v907 = vunpack.c.l.b16 %v302
    %v908 = vunpack.c.h.b16 %v302
    %v909 = vunpack.c.l.b16 %v303
    %v910 = vunpack.c.l.b16 %v304
    %v911 = vunpack.c.h.b16 %v304
    %v912 = vunpack.c.l.b16 %v305
    %v913 = vunpack.c.h.b16 %v305
    %v914 = vunpack.c.l.b16 %v306
    %v915 = vunpack.c.h.b16 %v306
    %v916 = vunpack.c.l.b16 %v307
    %v917 = vunpack.c.l.b16 %v308
    %v918 = vunpack.c.h.b16 %v308
    %v919 = vunpack.c.l.b16 %v309
    %v920 = vunpack.c.h.b16 %v309
    %v921 = vunpack.c.l.b16 %v310
    %v922 = vunpack.c.h.b16 %v310
    %v923 = vunpack.c.l.b16 %v311
    %v924 = vunpack.c.l.b16 %v312
    %v925 = vunpack.c.h.b16 %v312
    %v926 = vunpack.c.l.b16 %v313
    %v927 = vunpack.c.h.b16 %v313
    %v928 = vunpack.c.l.b16 %v314
    %v929 = vunpack.c.h.b16 %v314
    %v930 = vunpack.c.l.b16 %v315
    %v931 = vunpack.c.l.b16 %v316
    %v932 = vunpack.c.h.b16 %v316
    %v933 = vunpack.c.l.b16 %v317
    %v934 = vunpack.c.h.b16 %v317
    %v935 = vunpack.c.l.b16 %v318
    %v936 = vunpack.c.h.b16 %v318
    %v937 = vunpack.c.l.b16 %v319
    %v938 = vunpack.c.l.b16 %v320
    %v939 = vunpack.c.h.b16 %v320
    %v940 = vunpack.c.l.b16 %v321
    %v941 = vunpack.c.h.b16 %v321
    %v942 = vunpack.c.l.b16 %v322
    %v943 = vunpack.c.h.b16 %v322
    %v944 = vunpack.c.l.b16 %v323
    %v945 = vunpack.c.l.b16 %v324
    %v946 = vunpack.c.h.b16 %v324
    %v947 = vunpack.c.l.b16 %v325
    %v948 = vunpack.c.h.b16 %v325
    %v949 = vunpack.c.l.b16 %v326
    %v950 = vunpack.c.h.b16 %v326
    %v951 = vunpack.c.l.b16 %v327
    %v952 = vunpack.c.l.b16 %v328
    %v953 = vunpack.c.h.b16 %v328
    %v954 = vunpack.c.l.b16 %v329
    %v955 = vunpack.c.h.b16 %v329
    %v956 = vunpack.c.l.b16 %v330
    %v957 = vunpack.c.h.b16 %v330
    %v958 = vunpack.c.l.b16 %v331
    %v959 = vunpack.c.l.b16 %v332
    %v960 = vunpack.c.h.b16 %v332
    %v961 = vunpack.c.l.b16 %v333
    %v962 = vunpack.c.h.b16 %v333
    %v963 = vunpack.c.l.b16 %v334
    %v964 = vunpack.c.h.b16 %v334
    %v965 = vunpack.c.l.b16 %v335
    %v966 = vunpack.c.l.b16 %v336
    %v967 = vunpack.c.h.b16 %v336
    %v968 = vunpack.c.l.b16 %v337
    %v969 = vunpack.c.h.b16 %v337
    %v970 = vunpack.c.l.b16 %v338
    %v971 = vunpack.c.h.b16 %v338
    %v972 = vunpack.c.l.b16 %v339
    %v973 = vunpack.c.l.b16 %v340
    %v974 = vunpack.c.h.b16 %v340
    %v975 = vunpack.c.l.b16 %v341
    %v976 = vunpack.c.h.b16 %v341
    %v977 = vunpack.c.l.b16 %v342
    %v978 = vunpack.c.h.b16 %v342
    %v979 = vunpack.c.l.b16 %v343
    %v980 = vunpack.c.l.b16 %v344
    %v981 = vunpack.c.h.b16 %v344
    %v982 = vunpack.c.l.b16 %v345
    %v983 = vunpack.c.h.b16 %v345
    %v984 = vunpack.c.l.b16 %v346
    %v985 = vunpack.c.h.b16 %v346
    %v986 = vunpack.c.l.b16 %v347
    %v987 = vunpack.c.l.b16 %v348
    %v988 = vunpack.c.h.b16 %v348
    %v989 = vunpack.c.l.b16 %v349
    %v990 = vunpack.c.h.b16 %v349
    %v991 = vunpack.c.l.b16 %v350
    %v992 = vunpack.c.h.b16 %v350
    %v993 = vunpack.c.l.b16 %v351
    %v994 = vunpack.c.l.b16 %v352
    %v995 = vunpack.c.h.b16 %v352
    %v996 = vunpack.c.l.b16 %v353
    %v997 = vunpack.c.h.b16 %v353
    %v998 = vunpack.c.l.b16 %v354
    %v999 = vunpack.c.h.b16 %v354
    %v1000 = vunpack.c.l.b16 %v355
    %v1001 = vunpack.c.l.b16 %v356
    %v1002 = vunpack.c.h.b16 %v356
    %v1003 = vunpack.c.l.b16 %v357
    %v1004 = vunpack.c.h.b16 %v357
    %v1005 = vunpack.c.l.b16 %v358
    %v1006 = vunpack.c.h.b16 %v358
    %v1007 = vunpack.c.l.b16 %v359
    %v1008 = vunpack.c.l.b16 %v360
    %v1009 = vunpack.c.h.b16 %v360
    %v1010 = vunpack.c.l.b16 %v361
    %v1011 = vunpack.c.h.b16 %v361
    %v1012 = vunpack.c.l.b16 %v362
    %v1013 = vunpack.c.h.b16 %v362
    %v1014 = vunpack.c.l.b16 %v363
    %v1015 = vunpack.c.l.b16 %v364
    %v1016 = vunpack.c.h.b16 %v364
    %v1017 = vunpack.c.l.b16 %v365
    %v1018 = vunpack.c.h.b16 %v365
    %v1019 = vunpack.c.l.b16 %v366
    %v1020 = vunpack.c.h.b16 %v366
    %v1021 = vunpack.c.l.b16 %v367
    %v1022 = vunpack.c.l.b16 %v368
    %v1023 = vunpack.c.h.b16 %v368
    %v1024 = vunpack.c.l.b16 %v369
    %v1025 = vunpack.c.h.b16 %v369
    %v1026 = vunpack.c.l.b16 %v370
    %v1027 = vunpack.c.h.b16 %v370
    %v1028 = vunpack.c.l.b16 %v371
    %v1029 = vunpack.c.l.b16 %v372
    %v1030 = vunpack.c.h.b16 %v372
    %v1031 = vunpack.c.l.b16 %v373
    %v1032 = vunpack.c.h.b16 %v373
    %v1033 = vunpack.c.l.b16 %v374
    %v1034 = vunpack.c.h.b16 %v374
    %v1035 = vunpack.c.l.b16 %v375
    %v1036 = vunpack.c.l.b16 %v376
    %v1037 = vunpack.c.h.b16 %v376
    %v1038 = vunpack.c.l.b16 %v377
    %v1039 = vunpack.c.h.b16 %v377
    %v1040 = vunpack.c.l.b16 %v378
    %v1041 = vunpack.c.h.b16 %v378
    %v1042 = vunpack.c.l.b16 %v379
    %v1043 = vunpack.c.l.b16 %v380
    %v1044 = vunpack.c.h.b16 %v380
    %v1045 = vunpack.c.l.b16 %v381
    %v1046 = vunpack.c.h.b16 %v381
    %v1047 = vunpack.c.l.b16 %v382
    %v1048 = vunpack.c.h.b16 %v382
    %v1049 = vunpack.c.l.b16 %v383
    %v1050 = vunpack.c.l.b16 %v384
    %v1051 = vunpack.c.h.b16 %v384
    %v1052 = vunpack.c.l.b16 %v385
    %v1053 = vunpack.c.h.b16 %v385
    %v1054 = vunpack.c.l.b16 %v386
    %v1055 = vunpack.c.h.b16 %v386
    %v1056 = vunpack.c.l.b16 %v387
    %v1057 = vunpack.c.l.b16 %v388
    %v1058 = vunpack.c.h.b16 %v388
    %v1059 = vunpack.c.l.b16 %v389
    %v1060 = vunpack.c.h.b16 %v389
    %v1061 = vunpack.c.l.b16 %v390
    %v1062 = vunpack.c.h.b16 %v390
    %v1063 = vunpack.c.l.b16 %v391
    %v1064 = vunpack.c.l.b16 %v392
    %v1065 = vunpack.c.h.b16 %v392
    %v1066 = vunpack.c.l.b16 %v393
    %v1067 = vunpack.c.h.b16 %v393
    %v1068 = vunpack.c.l.b16 %v394
    %v1069 = vunpack.c.h.b16 %v394
    %v1070 = vunpack.c.l.b16 %v395
    %v1071 = vunpack.c.l.b16 %v396
    %v1072 = vunpack.c.h.b16 %v396
    %v1073 = vunpack.c.l.b16 %v397
    %v1074 = vunpack.c.h.b16 %v397
    %v1075 = vunpack.c.l.b16 %v398
    %v1076 = vunpack.c.h.b16 %v398
    %v1077 = vunpack.c.l.b16 %v399
    %v1078 = vunpack.c.l.b16 %v400
    %v1079 = vunpack.c.h.b16 %v400
    %v1080 = vunpack.c.l.b16 %v401
    %v1081 = vunpack.c.h.b16 %v401
    %v1082 = vunpack.c.l.b16 %v402
    %v1083 = vunpack.c.h.b16 %v402
    %v1084 = vunpack.c.l.b16 %v403
    %v1085 = vunpack.c.l.b16 %v404
    %v1086 = vunpack.c.h.b16 %v404
    %v1087 = vunpack.c.l.b16 %v405
    %v1088 = vunpack.c.h.b16 %v405
    %v1089 = vunpack.c.l.b16 %v406
    %v1090 = vunpack.c.h.b16 %v406
    %v1091 = vunpack.c.l.b16 %v407
    %v1092 = vunpack.c.l.b16 %v408
    %v1093 = vunpack.c.h.b16 %v408
    %v1094 = vunpack.c.l.b16 %v409
    %v1095 = vunpack.c.h.b16 %v409
    %v1096 = vunpack.c.l.b16 %v410
    %v1097 = vunpack.c.h.b16 %v410
    %v1098 = vunpack.c.l.b16 %v411
    %v1099 = vunpack.c.l.b16 %v412
    %v1100 = vunpack.c.h.b16 %v412
    %v1101 = vunpack.c.l.b16 %v413
    %v1102 = vunpack.c.h.b16 %v413
    %v1103 = vunpack.c.l.b16 %v414
    %v1104 = vunpack.c.h.b16 %v414
    %v1105 = vunpack.c.l.b16 %v415
    %v1106 = vunpack.c.l.b16 %v416
    %v1107 = vunpack.c.h.b16 %v416
    %v1108 = vunpack.c.l.b16 %v417
    %v1109 = vunpack.c.h.b16 %v417
    %v1110 = vunpack.c.l.b16 %v418
    %v1111 = vunpack.c.h.b16 %v418
    %v1112 = vunpack.c.l.b16 %v419
    %v1113 = vunpack.c.l.b16 %v420
    %v1114 = vunpack.c.h.b16 %v420
    %v1115 = vunpack.c.l.b16 %v421
    %v1116 = vunpack.c.h.b16 %v421
    %v1117 = vunpack.c.l.b16 %v422
    %v1118 = vunpack.c.h.b16 %v422
    %v1119 = vunpack.c.l.b16 %v423
    %v1120 = vunpack.c.l.b16 %v424
    %v1121 = vunpack.c.h.b16 %v424
    %v1122 = vunpack.c.l.b16 %v425
    %v1123 = vunpack.c.h.b16 %v425
    %v1124 = vunpack.c.l.b16 %v426
    %v1125 = vunpack.c.h.b16 %v426
    %v1126 = vunpack.c.l.b16 %v427
    %v1127 = vunpack.c.l.b16 %v428
    %v1128 = vunpack.c.h.b16 %v428
    %v1129 = vunpack.c.l.b16 %v429
    %v1130 = vunpack.c.h.b16 %v429
    %v1131 = vunpack.c.l.b16 %v430
    %v1132 = vunpack.c.h.b16 %v430
    %v1133 = vunpack.c.l.b16 %v431
    %v1134 = vunpack.c.l.b16 %v432
    %v1135 = vunpack.c.h.b16 %v432
    %v1136 = vunpack.c.l.b16 %v433
    %v1137 = vunpack.c.h.b16 %v433
    %v1138 = vunpack.c.l.b16 %v434
    %v1139 = vunpack.c.h.b16 %v434
    %v1140 = vunpack.c.l.b16 %v435
    %v1141 = vunpack.c.l.b16 %v436
    %v1142 = vunpack.c.h.b16 %v436
    %v1143 = vunpack.c.l.b16 %v437
    %v1144 = vunpack.c.h.b16 %v437
    %v1145 = vunpack.c.l.b16 %v438
    %v1146 = vunpack.c.h.b16 %v438
    %v1147 = vunpack.c.l.b16 %v439
    %v1148 = vunpack.c.l.b16 %v440
    %v1149 = vunpack.c.h.b16 %v440
    %v1150 = vunpack.c.l.b16 %v441
    %v1151 = vunpack.c.h.b16 %v441
    %v1152 = vunpack.c.l.b16 %v442
    %v1153 = vunpack.c.h.b16 %v442
    %v1154 = vunpack.c.l.b16 %v443
    %v1155 = vunpack.c.l.b16 %v444
    %v1156 = vunpack.c.h.b16 %v444
    %v1157 = vunpack.c.l.b16 %v445
    %v1158 = vunpack.c.h.b16 %v445
    %v1159 = vunpack.c.l.b16 %v446
    %v1160 = vunpack.c.h.b16 %v446
    %v1161 = vunpack.c.l.b16 %v447
    %v1162 = vunpack.c.l.b16 %v448
    %v1163 = vunpack.c.h.b16 %v448
    %v1164 = vunpack.c.l.b16 %v449
    %v1165 = vunpack.c.h.b16 %v449
    %v1166 = vunpack.c.l.b16 %v450
    %v1167 = vunpack.c.h.b16 %v450
    %v1168 = vunpack.c.l.b16 %v451
    %v1169 = vunpack.c.l.b16 %v452
    %v1170 = vunpack.c.h.b16 %v452
    %v1171 = vunpack.c.l.b16 %v453
    %v1172 = vunpack.c.h.b16 %v453
    %v1173 = vunpack.c.l.b16 %v454
    %v1174 = vunpack.c.h.b16 %v454
    %v1175 = vunpack.c.l.b16 %v455
    %v1176 = vunpack.c.l.b16 %v456
    %v1177 = vunpack.c.h.b16 %v456
    %v1178 = vunpack.c.l.b16 %v457
    %v1179 = vunpack.c.h.b16 %v457
    %v1180 = vunpack.c.l.b16 %v458
    %v1181 = vunpack.c.h.b16 %v458
    %v1182 = vunpack.c.l.b16 %v459
    %v1183 = vunpack.c.l.b16 %v460
    %v1184 = vunpack.c.h.b16 %v460
    %v1185 = vunpack.c.l.b16 %v461
    %v1186 = vunpack.c.h.b16 %v461
    %v1187 = vunpack.c.l.b16 %v462
    %v1188 = vunpack.c.h.b16 %v462
    %v1189 = vunpack.c.l.b16 %v463
    %v1190 = vunpack.c.l.b16 %v464
    %v1191 = vunpack.c.h.b16 %v464
    %v1192 = vunpack.c.l.b16 %v465
    %v1193 = vunpack.c.h.b16 %v465
    %v1194 = vunpack.c.l.b16 %v466
    %v1195 = vunpack.c.h.b16 %v466
    %v1196 = vunpack.c.l.b16 %v467
    %v1197 = vunpack.c.l.b16 %v468
    %v1198 = vunpack.c.h.b16 %v468
    %v1199 = vunpack.c.l.b16 %v469
    %v1200 = vunpack.c.h.b16 %v469
    %v1201 = vunpack.c.l.b16 %v470
    %v1202 = vunpack.c.h.b16 %v470
    %v1203 = vunpack.c.l.b16 %v471
    %v1204 = vunpack.c.l.b16 %v472
    %v1205 = vunpack.c.h.b16 %v472
    %v1206 = vunpack.c.l.b16 %v473
    %v1207 = vunpack.c.h.b16 %v473
    %v1208 = vunpack.c.l.b16 %v474
    %v1209 = vunpack.c.h.b16 %v474
    %v1210 = vunpack.c.l.b16 %v475
    %v1211 = vunpack.c.l.b16 %v476
    %v1212 = vunpack.c.h.b16 %v476
    %v1213 = vunpack.c.l.b16 %v477
    %v1214 = vunpack.c.h.b16 %v477
    %v1215 = vunpack.c.l.b16 %v478
    %v1216 = vunpack.c.h.b16 %v478
    %v1217 = vunpack.c.l.b16 %v479
    %v1218 = vunpack.c.l.b16 %v480
    %v1219 = vunpack.c.h.b16 %v480
    %v1220 = vunpack.c.l.b16 %v481
    %v1221 = vunpack.c.h.b16 %v481
    %v1222 = vunpack.c.l.b16 %v482
    %v1223 = vunpack.c.h.b16 %v482
    %v1224 = vunpack.c.l.b16 %v483
    %v1225 = vpack.c.b16 %v784, %v777
    %v1226 = vpack.c.b16 %v785, %v778
    %v1227 = vpack.c.b16 %v786, %v779
    %v1228 = vpack.c.b16 %v787, %v780
    %v1229 = vpack.c.b16 %v788, %v781
    %v1230 = vpack.c.b16 %v789, %v782
    %v1231 = vpack.c.b16 %v790, %v783
    %v1232 = vpack.c.b16 %v798, %v791
    %v1233 = vpack.c.b16 %v799, %v792
    %v1234 = vpack.c.b16 %v800, %v793
    %v1235 = vpack.c.b16 %v801, %v794
    %v1236 = vpack.c.b16 %v802, %v795
    %v1237 = vpack.c.b16 %v803, %v796
    %v1238 = vpack.c.b16 %v804, %v797
    %v1239 = vpack.c.b16 %v812, %v805
    %v1240 = vpack.c.b16 %v813, %v806
    %v1241 = vpack.c.b16 %v814, %v807
    %v1242 = vpack.c.b16 %v815, %v808
    %v1243 = vpack.c.b16 %v816, %v809
    %v1244 = vpack.c.b16 %v817, %v810
    %v1245 = vpack.c.b16 %v818, %v811
    %v1246 = vpack.c.b16 %v826, %v819
    %v1247 = vpack.c.b16 %v827, %v820
    %v1248 = vpack.c.b16 %v828, %v821
    %v1249 = vpack.c.b16 %v829, %v822
    %v1250 = vpack.c.b16 %v830, %v823
    %v1251 = vpack.c.b16 %v831, %v824
    %v1252 = vpack.c.b16 %v832, %v825
    %v1253 = vpack.c.b16 %v840, %v833
    %v1254 = vpack.c.b16 %v841, %v834
    %v1255 = vpack.c.b16 %v842, %v835
    %v1256 = vpack.c.b16 %v843, %v836
    %v1257 = vpack.c.b16 %v844, %v837
    %v1258 = vpack.c.b16 %v845, %v838
    %v1259 = vpack.c.b16 %v846, %v839
    %v1260 = vpack.c.b16 %v854, %v847
    %v1261 = vpack.c.b16 %v855, %v848
    %v1262 = vpack.c.b16 %v856, %v849
    %v1263 = vpack.c.b16 %v857, %v850
    %v1264 = vpack.c.b16 %v858, %v851
    %v1265 = vpack.c.b16 %v859, %v852
    %v1266 = vpack.c.b16 %v860, %v853
    %v1267 = vpack.c.b16 %v868, %v861
    %v1268 = vpack.c.b16 %v869, %v862
    %v1269 = vpack.c.b16 %v870, %v863
    %v1270 = vpack.c.b16 %v871, %v864
    %v1271 = vpack.c.b16 %v872, %v865
    %v1272 = vpack.c.b16 %v873, %v866
    %v1273 = vpack.c.b16 %v874, %v867
    %v1274 = vpack.c.b16 %v882, %v875
    %v1275 = vpack.c.b16 %v883, %v876
    %v1276 = vpack.c.b16 %v884, %v877
    %v1277 = vpack.c.b16 %v885, %v878
    %v1278 = vpack.c.b16 %v886, %v879
    %v1279 = vpack.c.b16 %v887, %v880
    %v1280 = vpack.c.b16 %v888, %v881
    %v1281 = vpack.c.b16 %v896, %v889
    %v1282 = vpack.c.b16 %v897, %v890
    %v1283 = vpack.c.b16 %v898, %v891
    %v1284 = vpack.c.b16 %v899, %v892
    %v1285 = vpack.c.b16 %v900, %v893
    %v1286 = vpack.c.b16 %v901, %v894
    %v1287 = vpack.c.b16 %v902, %v895
    %v1288 = vpack.c.b16 %v910, %v903
    %v1289 = vpack.c.b16 %v911, %v904
    %v1290 = vpack.c.b16 %v912, %v905
    %v1291 = vpack.c.b16 %v913, %v906
    %v1292 = vpack.c.b16 %v914, %v907
    %v1293 = vpack.c.b16 %v915, %v908
    %v1294 = vpack.c.b16 %v916, %v909
    %v1295 = vpack.c.b16 %v924, %v917
    %v1296 = vpack.c.b16 %v925, %v918
    %v1297 = vpack.c.b16 %v926, %v919
    %v1298 = vpack.c.b16 %v927, %v920
    %v1299 = vpack.c.b16 %v928, %v921
    %v1300 = vpack.c.b16 %v929, %v922
    %v1301 = vpack.c.b16 %v930, %v923
    %v1302 = vpack.c.b16 %v938, %v931
    %v1303 = vpack.c.b16 %v939, %v932
    %v1304 = vpack.c.b16 %v940, %v933
    %v1305 = vpack.c.b16 %v941, %v934
    %v1306 = vpack.c.b16 %v942, %v935
    %v1307 = vpack.c.b16 %v943, %v936
    %v1308 = vpack.c.b16 %v944, %v937
    %v1309 = vpack.c.b16 %v952, %v945
    %v1310 = vpack.c.b16 %v953, %v946
    %v1311 = vpack.c.b16 %v954, %v947
    %v1312 = vpack.c.b16 %v955, %v948
    %v1313 = vpack.c.b16 %v956, %v949
    %v1314 = vpack.c.b16 %v957, %v950
    %v1315 = vpack.c.b16 %v958, %v951
    %v1316 = vpack.c.b16 %v966, %v959
    %v1317 = vpack.c.b16 %v967, %v960
    %v1318 = vpack.c.b16 %v968, %v961
    %v1319 = vpack.c.b16 %v969, %v962
    %v1320 = vpack.c.b16 %v970, %v963
    %v1321 = vpack.c.b16 %v971, %v964
    %v1322 = vpack.c.b16 %v972, %v965
    %v1323 = vpack.c.b16 %v980, %v973
    %v1324 = vpack.c.b16 %v981, %v974
    %v1325 = vpack.c.b16 %v982, %v975
    %v1326 = vpack.c.b16 %v983, %v976
    %v1327 = vpack.c.b16 %v984, %v977
    %v1328 = vpack.c.b16 %v985, %v978
    %v1329 = vpack.c.b16 %v986, %v979
    %v1330 = vpack.c.b16 %v994, %v987
    %v1331 = vpack.c.b16 %v995, %v988
    %v1332 = vpack.c.b16 %v996, %v989
    %v1333 = vpack.c.b16 %v997, %v990
    %v1334 = vpack.c.b16 %v998, %v991
    %v1335 = vpack.c.b16 %v999, %v992
    %v1336 = vpack.c.b16 %v1000, %v993
    %v1337 = vpack.c.b16 %v1008, %v1001
    %v1338 = vpack.c.b16 %v1009, %v1002
    %v1339 = vpack.c.b16 %v1010, %v1003
    %v1340 = vpack.c.b16 %v1011, %v1004
    %v1341 = vpack.c.b16 %v1012, %v1005
    %v1342 = vpack.c.b16 %v1013, %v1006
    %v1343 = vpack.c.b16 %v1014, %v1007
    %v1344 = vpack.c.b16 %v1022, %v1015
    %v1345 = vpack.c.b16 %v1023, %v1016
    %v1346 = vpack.c.b16 %v1024, %v1017
    %v1347 = vpack.c.b16 %v1025, %v1018
    %v1348 = vpack.c.b16 %v1026, %v1019
    %v1349 = vpack.c.b16 %v1027, %v1020
    %v1350 = vpack.c.b16 %v1028, %v1021
    %v1351 = vpack.c.b16 %v1036, %v1029
    %v1352 = vpack.c.b16 %v1037, %v1030
    %v1353 = vpack.c.b16 %v1038, %v1031
    %v1354 = vpack.c.b16 %v1039, %v1032
    %v1355 = vpack.c.b16 %v1040, %v1033
    %v1356 = vpack.c.b16 %v1041, %v1034
    %v1357 = vpack.c.b16 %v1042, %v1035
    %v1358 = vpack.c.b16 %v1050, %v1043
    %v1359 = vpack.c.b16 %v1051, %v1044
    %v1360 = vpack.c.b16 %v1052, %v1045
    %v1361 = vpack.c.b16 %v1053, %v1046
    %v1362 = vpack.c.b16 %v1054, %v1047
    %v1363 = vpack.c.b16 %v1055, %v1048
    %v1364 = vpack.c.b16 %v1056, %v1049
    %v1365 = vpack.c.b16 %v1064, %v1057
    %v1366 = vpack.c.b16 %v1065, %v1058
    %v1367 = vpack.c.b16 %v1066, %v1059
    %v1368 = vpack.c.b16 %v1067, %v1060
    %v1369 = vpack.c.b16 %v1068, %v1061
    %v1370 = vpack.c.b16 %v1069, %v1062
    %v1371 = vpack.c.b16 %v1070, %v1063
    %v1372 = vpack.c.b16 %v1078, %v1071
    %v1373 = vpack.c.b16 %v1079, %v1072
    %v1374 = vpack.c.b16 %v1080, %v1073
    %v1375 = vpack.c.b16 %v1081, %v1074
    %v1376 = vpack.c.b16 %v1082, %v1075
    %v1377 = vpack.c.b16 %v1083, %v1076
    %v1378 = vpack.c.b16 %v1084, %v1077
    %v1379 = vpack.c.b16 %v1092, %v1085
    %v1380 = vpack.c.b16 %v1093, %v1086
    %v1381 = vpack.c.b16 %v1094, %v1087
    %v1382 = vpack.c.b16 %v1095, %v1088
    %v1383 = vpack.c.b16 %v1096, %v1089
    %v1384 = vpack.c.b16 %v1097, %v1090
    %v1385 = vpack.c.b16 %v1098, %v1091
    %v1386 = vpack.c.b16 %v1106, %v1099
    %v1387 = vpack.c.b16 %v1107, %v1100
    %v1388 = vpack.c.b16 %v1108, %v1101
    %v1389 = vpack.c.b16 %v1109, %v1102
    %v1390 = vpack.c.b16 %v1110, %v1103
    %v1391 = vpack.c.b16 %v1111, %v1104
    %v1392 = vpack.c.b16 %v1112, %v1105
    %v1393 = vpack.c.b16 %v1120, %v1113
    %v1394 = vpack.c.b16 %v1121, %v1114
    %v1395 = vpack.c.b16 %v1122, %v1115
    %v1396 = vpack.c.b16 %v1123, %v1116
    %v1397 = vpack.c.b16 %v1124, %v1117
    %v1398 = vpack.c.b16 %v1125, %v1118
    %v1399 = vpack.c.b16 %v1126, %v1119
    %v1400 = vpack.c.b16 %v1134, %v1127
    %v1401 = vpack.c.b16 %v1135, %v1128
    %v1402 = vpack.c.b16 %v1136, %v1129
    %v1403 = vpack.c.b16 %v1137, %v1130
    %v1404 = vpack.c.b16 %v1138, %v1131
    %v1405 = vpack.c.b16 %v1139, %v1132
    %v1406 = vpack.c.b16 %v1140, %v1133
    %v1407 = vpack.c.b16 %v1148, %v1141
    %v1408 = vpack.c.b16 %v1149, %v1142
    %v1409 = vpack.c.b16 %v1150, %v1143
    %v1410 = vpack.c.b16 %v1151, %v1144
    %v1411 = vpack.c.b16 %v1152, %v1145
    %v1412 = vpack.c.b16 %v1153, %v1146
    %v1413 = vpack.c.b16 %v1154, %v1147
    %v1414 = vpack.c.b16 %v1162, %v1155
    %v1415 = vpack.c.b16 %v1163, %v1156
    %v1416 = vpack.c.b16 %v1164, %v1157
    %v1417 = vpack.c.b16 %v1165, %v1158
    %v1418 = vpack.c.b16 %v1166, %v1159
    %v1419 = vpack.c.b16 %v1167, %v1160
    %v1420 = vpack.c.b16 %v1168, %v1161
    %v1421 = vpack.c.b16 %v1176, %v1169
    %v1422 = vpack.c.b16 %v1177, %v1170
    %v1423 = vpack.c.b16 %v1178, %v1171
    %v1424 = vpack.c.b16 %v1179, %v1172
    %v1425 = vpack.c.b16 %v1180, %v1173
    %v1426 = vpack.c.b16 %v1181, %v1174
    %v1427 = vpack.c.b16 %v1182, %v1175
    %v1428 = vpack.c.b16 %v1190, %v1183
    %v1429 = vpack.c.b16 %v1191, %v1184
    %v1430 = vpack.c.b16 %v1192, %v1185
    %v1431 = vpack.c.b16 %v1193, %v1186
    %v1432 = vpack.c.b16 %v1194, %v1187
    %v1433 = vpack.c.b16 %v1195, %v1188
    %v1434 = vpack.c.b16 %v1196, %v1189
    %v1435 = vpack.c.b16 %v1204, %v1197
    %v1436 = vpack.c.b16 %v1205, %v1198
    %v1437 = vpack.c.b16 %v1206, %v1199
    %v1438 = vpack.c.b16 %v1207, %v1200
    %v1439 = vpack.c.b16 %v1208, %v1201
    %v1440 = vpack.c.b16 %v1209, %v1202
    %v1441 = vpack.c.b16 %v1210, %v1203
    %v1442 = vpack.c.b16 %v1218, %v1211
    %v1443 = vpack.c.b16 %v1219, %v1212
    %v1444 = vpack.c.b16 %v1220, %v1213
    %v1445 = vpack.c.b16 %v1221, %v1214
    %v1446 = vpack.c.b16 %v1222, %v1215
    %v1447 = vpack.c.b16 %v1223, %v1216
    %v1448 = vpack.c.b16 %v1224, %v1217
    %1673 = vmatprep.subr.bf16.mxu0 %v1226
    %1674 = vmatpush1.bf16.msra.mxu0 %v1225
    %1675 = vmatprep.subr.bf16.mxu0 %v1233
    %1676 = vmatpush1.bf16.msra.mxu0 %v1232
    %1677 = vmatprep.subr.bf16.mxu0 %v1240
    %1678 = vmatpush1.bf16.msra.mxu0 %v1239
    %1679 = vmatprep.subr.bf16.mxu0 %v1247
    %1680 = vmatpush1.bf16.msra.mxu0 %v1246
    %1681 = vmatprep.subr.bf16.mxu0 %v1254
    %1682 = vmatpush1.bf16.msra.mxu0 %v1253
    %1683 = vmatprep.subr.bf16.mxu0 %v1261
    %1684 = vmatpush1.bf16.msra.mxu0 %v1260
    %1685 = vmatprep.subr.bf16.mxu0 %v1268
    %1686 = vmatpush1.bf16.msra.mxu0 %v1267
    %1687 = vmatprep.subr.bf16.mxu0 %v1275
    %1688 = vmatpush1.bf16.msra.mxu0 %v1274
    %1689 = vmatprep.subr.bf16.mxu0 %v1282
    %1690 = vmatpush1.bf16.msra.mxu0 %v1281
    %1691 = vmatprep.subr.bf16.mxu0 %v1289
    %1692 = vmatpush1.bf16.msra.mxu0 %v1288
    %1693 = vmatprep.subr.bf16.mxu0 %v1296
    %1694 = vmatpush1.bf16.msra.mxu0 %v1295
    %1695 = vmatprep.subr.bf16.mxu0 %v1303
    %1696 = vmatpush1.bf16.msra.mxu0 %v1302
    %1697 = vmatprep.subr.bf16.mxu0 %v1310
    %1698 = vmatpush1.bf16.msra.mxu0 %v1309
    %1699 = vmatprep.subr.bf16.mxu0 %v1317
    %1700 = vmatpush1.bf16.msra.mxu0 %v1316
    %1701 = vmatprep.subr.bf16.mxu0 %v1324
    %1702 = vmatpush1.bf16.msra.mxu0 %v1323
    %1703 = vmatprep.subr.bf16.mxu0 %v1331
    %1704 = vmatpush1.bf16.msra.mxu0 %v1330
    %1705 = vmatprep.mubr.bf16.mxu0 %v225
    %1706 = vmatmul.mubr.bf16.gmra.mrb[0].mxu0 %v224
    %v1707 = vpop.f32.mrb[0].mxu0
    %v1708 = vadd.f32 %v489, %v1707
    %v1709 = vpop.f32.mrb[0].mxu0
    %v1710 = vadd.f32 %v493, %v1709
    %v1711 = vpop.f32.mrb[0].mxu0
    %v1712 = vpop.f32.mrb[0].mxu0
    %1713 = vdwg.mxu0
    %1714 = vmatprep.subr.bf16.mxu0 %v1338
    %1715 = vmatpush1.bf16.msra.mxu0 %v1337
    %1716 = vmatprep.subr.bf16.mxu0 %v1345
    %1717 = vmatpush1.bf16.msra.mxu0 %v1344
    %1718 = vmatprep.subr.bf16.mxu0 %v1352
    %1719 = vmatpush1.bf16.msra.mxu0 %v1351
    %1720 = vmatprep.subr.bf16.mxu0 %v1359
    %1721 = vmatpush1.bf16.msra.mxu0 %v1358
    %1722 = vmatprep.subr.bf16.mxu0 %v1366
    %1723 = vmatpush1.bf16.msra.mxu0 %v1365
    %1724 = vmatprep.subr.bf16.mxu0 %v1373
    %1725 = vmatpush1.bf16.msra.mxu0 %v1372
    %1726 = vmatprep.subr.bf16.mxu0 %v1380
    %1727 = vmatpush1.bf16.msra.mxu0 %v1379
    %1728 = vmatprep.subr.bf16.mxu0 %v1387
    %1729 = vmatpush1.bf16.msra.mxu0 %v1386
    %1730 = vmatprep.subr.bf16.mxu0 %v1394
    %1731 = vmatpush1.bf16.msra.mxu0 %v1393
    %1732 = vmatprep.subr.bf16.mxu0 %v1401
    %1733 = vmatpush1.bf16.msra.mxu0 %v1400
    %1734 = vmatprep.subr.bf16.mxu0 %v1408
    %1735 = vmatpush1.bf16.msra.mxu0 %v1407
    %1736 = vmatprep.subr.bf16.mxu0 %v1415
    %1737 = vmatpush1.bf16.msra.mxu0 %v1414
    %1738 = vmatprep.subr.bf16.mxu0 %v1422
    %1739 = vmatpush1.bf16.msra.mxu0 %v1421
    %1740 = vmatprep.subr.bf16.mxu0 %v1429
    %1741 = vmatpush1.bf16.msra.mxu0 %v1428
    %1742 = vmatprep.subr.bf16.mxu0 %v1436
    %1743 = vmatpush1.bf16.msra.mxu0 %v1435
    %1744 = vmatprep.subr.bf16.mxu0 %v1443
    %1745 = vmatpush1.bf16.msra.mxu0 %v1442
    %1746 = vmatprep.mubr.bf16.mxu0 %v227
    %1747 = vmatmul.mubr.bf16.gmra.mrb[0].mxu0 %v226
    %v1748 = vpop.f32.mrb[0].mxu0
    %v1749 = vadd.f32 %v1708, %v1748
    %v1750 = vpop.f32.mrb[0].mxu0
    %v1751 = vadd.f32 %v1710, %v1750
    %v1752 = vpop.f32.mrb[0].mxu0
    %v1753 = vpop.f32.mrb[0].mxu0
    %1754 = vdwg.mxu0
    %1755 = vmatprep.subr.bf16.mxu0 %v1228
    %1756 = vmatpush1.bf16.msra.mxu0 %v1227
    %1757 = vmatprep.subr.bf16.mxu0 %v1235
    %1758 = vmatpush1.bf16.msra.mxu0 %v1234
    %1759 = vmatprep.subr.bf16.mxu0 %v1242
    %1760 = vmatpush1.bf16.msra.mxu0 %v1241
    %1761 = vmatprep.subr.bf16.mxu0 %v1249
    %1762 = vmatpush1.bf16.msra.mxu0 %v1248
    %1763 = vmatprep.subr.bf16.mxu0 %v1256
    %1764 = vmatpush1.bf16.msra.mxu0 %v1255
    %1765 = vmatprep.subr.bf16.mxu0 %v1263
    %1766 = vmatpush1.bf16.msra.mxu0 %v1262
    %1767 = vmatprep.subr.bf16.mxu0 %v1270
    %1768 = vmatpush1.bf16.msra.mxu0 %v1269
    %1769 = vmatprep.subr.bf16.mxu0 %v1277
    %1770 = vmatpush1.bf16.msra.mxu0 %v1276
    %1771 = vmatprep.subr.bf16.mxu0 %v1284
    %1772 = vmatpush1.bf16.msra.mxu0 %v1283
    %1773 = vmatprep.subr.bf16.mxu0 %v1291
    %1774 = vmatpush1.bf16.msra.mxu0 %v1290
    %1775 = vmatprep.subr.bf16.mxu0 %v1298
    %1776 = vmatpush1.bf16.msra.mxu0 %v1297
    %1777 = vmatprep.subr.bf16.mxu0 %v1305
    %1778 = vmatpush1.bf16.msra.mxu0 %v1304
    %1779 = vmatprep.subr.bf16.mxu0 %v1312
    %1780 = vmatpush1.bf16.msra.mxu0 %v1311
    %1781 = vmatprep.subr.bf16.mxu0 %v1319
    %1782 = vmatpush1.bf16.msra.mxu0 %v1318
    %1783 = vmatprep.subr.bf16.mxu0 %v1326
    %1784 = vmatpush1.bf16.msra.mxu0 %v1325
    %1785 = vmatprep.subr.bf16.mxu0 %v1333
    %1786 = vmatpush1.bf16.msra.mxu0 %v1332
    %1787 = vmatprep.mubr.bf16.mxu0 %v225
    %1788 = vmatmul.mubr.bf16.gmra.mrb[0].mxu0 %v224
    %v1789 = vpop.f32.mrb[0].mxu0
    %v1790 = vadd.f32 %v497, %v1789
    %v1791 = vpop.f32.mrb[0].mxu0
    %v1792 = vadd.f32 %v501, %v1791
    %v1793 = vpop.f32.mrb[0].mxu0
    %v1794 = vpop.f32.mrb[0].mxu0
    %1795 = vdwg.mxu0
    %1796 = vmatprep.subr.bf16.mxu0 %v1340
    %1797 = vmatpush1.bf16.msra.mxu0 %v1339
    %1798 = vmatprep.subr.bf16.mxu0 %v1347
    %1799 = vmatpush1.bf16.msra.mxu0 %v1346
    %1800 = vmatprep.subr.bf16.mxu0 %v1354
    %1801 = vmatpush1.bf16.msra.mxu0 %v1353
    %1802 = vmatprep.subr.bf16.mxu0 %v1361
    %1803 = vmatpush1.bf16.msra.mxu0 %v1360
    %1804 = vmatprep.subr.bf16.mxu0 %v1368
    %1805 = vmatpush1.bf16.msra.mxu0 %v1367
    %1806 = vmatprep.subr.bf16.mxu0 %v1375
    %1807 = vmatpush1.bf16.msra.mxu0 %v1374
    %1808 = vmatprep.subr.bf16.mxu0 %v1382
    %1809 = vmatpush1.bf16.msra.mxu0 %v1381
    %1810 = vmatprep.subr.bf16.mxu0 %v1389
    %1811 = vmatpush1.bf16.msra.mxu0 %v1388
    %1812 = vmatprep.subr.bf16.mxu0 %v1396
    %1813 = vmatpush1.bf16.msra.mxu0 %v1395
    %1814 = vmatprep.subr.bf16.mxu0 %v1403
    %1815 = vmatpush1.bf16.msra.mxu0 %v1402
    %1816 = vmatprep.subr.bf16.mxu0 %v1410
    %1817 = vmatpush1.bf16.msra.mxu0 %v1409
    %1818 = vmatprep.subr.bf16.mxu0 %v1417
    %1819 = vmatpush1.bf16.msra.mxu0 %v1416
    %1820 = vmatprep.subr.bf16.mxu0 %v1424
    %1821 = vmatpush1.bf16.msra.mxu0 %v1423
    %1822 = vmatprep.subr.bf16.mxu0 %v1431
    %1823 = vmatpush1.bf16.msra.mxu0 %v1430
    %1824 = vmatprep.subr.bf16.mxu0 %v1438
    %1825 = vmatpush1.bf16.msra.mxu0 %v1437
    %1826 = vmatprep.subr.bf16.mxu0 %v1445
    %1827 = vmatpush1.bf16.msra.mxu0 %v1444
    %1828 = vmatprep.mubr.bf16.mxu0 %v227
    %1829 = vmatmul.mubr.bf16.gmra.mrb[0].mxu0 %v226
    %v1830 = vpop.f32.mrb[0].mxu0
    %v1831 = vadd.f32 %v1790, %v1830
    %v1832 = vpop.f32.mrb[0].mxu0
    %v1833 = vadd.f32 %v1792, %v1832
    %v1834 = vpop.f32.mrb[0].mxu0
    %v1835 = vpop.f32.mrb[0].mxu0
    %1836 = vdwg.mxu0
    %1837 = vmatprep.subr.bf16.mxu0 %v1230
    %1838 = vmatpush1.bf16.msra.mxu0 %v1229
    %1839 = vmatprep.subr.bf16.mxu0 %v1237
    %1840 = vmatpush1.bf16.msra.mxu0 %v1236
    %1841 = vmatprep.subr.bf16.mxu0 %v1244
    %1842 = vmatpush1.bf16.msra.mxu0 %v1243
    %1843 = vmatprep.subr.bf16.mxu0 %v1251
    %1844 = vmatpush1.bf16.msra.mxu0 %v1250
    %1845 = vmatprep.subr.bf16.mxu0 %v1258
    %1846 = vmatpush1.bf16.msra.mxu0 %v1257
    %1847 = vmatprep.subr.bf16.mxu0 %v1265
    %1848 = vmatpush1.bf16.msra.mxu0 %v1264
    %1849 = vmatprep.subr.bf16.mxu0 %v1272
    %1850 = vmatpush1.bf16.msra.mxu0 %v1271
    %1851 = vmatprep.subr.bf16.mxu0 %v1279
    %1852 = vmatpush1.bf16.msra.mxu0 %v1278
    %1853 = vmatprep.subr.bf16.mxu0 %v1286
    %1854 = vmatpush1.bf16.msra.mxu0 %v1285
    %1855 = vmatprep.subr.bf16.mxu0 %v1293
    %1856 = vmatpush1.bf16.msra.mxu0 %v1292
    %1857 = vmatprep.subr.bf16.mxu0 %v1300
    %1858 = vmatpush1.bf16.msra.mxu0 %v1299
    %1859 = vmatprep.subr.bf16.mxu0 %v1307
    %1860 = vmatpush1.bf16.msra.mxu0 %v1306
    %1861 = vmatprep.subr.bf16.mxu0 %v1314
    %1862 = vmatpush1.bf16.msra.mxu0 %v1313
    %1863 = vmatprep.subr.bf16.mxu0 %v1321
    %1864 = vmatpush1.bf16.msra.mxu0 %v1320
    %1865 = vmatprep.subr.bf16.mxu0 %v1328
    %1866 = vmatpush1.bf16.msra.mxu0 %v1327
    %1867 = vmatprep.subr.bf16.mxu0 %v1335
    %1868 = vmatpush1.bf16.msra.mxu0 %v1334
    %1869 = vmatprep.mubr.bf16.mxu0 %v225
    %1870 = vmatmul.mubr.bf16.gmra.mrb[0].mxu0 %v224
    %v1871 = vpop.f32.mrb[0].mxu0
    %v1872 = vadd.f32 %v505, %v1871
    %v1873 = vpop.f32.mrb[0].mxu0
    %v1874 = vadd.f32 %v509, %v1873
    %v1875 = vpop.f32.mrb[0].mxu0
    %v1876 = vpop.f32.mrb[0].mxu0
    %1877 = vdwg.mxu0
    %1878 = vmatprep.subr.bf16.mxu0 %v1342
    %1879 = vmatpush1.bf16.msra.mxu0 %v1341
    %1880 = vmatprep.subr.bf16.mxu0 %v1349
    %1881 = vmatpush1.bf16.msra.mxu0 %v1348
    %1882 = vmatprep.subr.bf16.mxu0 %v1356
    %1883 = vmatpush1.bf16.msra.mxu0 %v1355
    %1884 = vmatprep.subr.bf16.mxu0 %v1363
    %1885 = vmatpush1.bf16.msra.mxu0 %v1362
    %1886 = vmatprep.subr.bf16.mxu0 %v1370
    %1887 = vmatpush1.bf16.msra.mxu0 %v1369
    %1888 = vmatprep.subr.bf16.mxu0 %v1377
    %1889 = vmatpush1.bf16.msra.mxu0 %v1376
    %1890 = vmatprep.subr.bf16.mxu0 %v1384
    %1891 = vmatpush1.bf16.msra.mxu0 %v1383
    %1892 = vmatprep.subr.bf16.mxu0 %v1391
    %1893 = vmatpush1.bf16.msra.mxu0 %v1390
    %1894 = vmatprep.subr.bf16.mxu0 %v1398
    %1895 = vmatpush1.bf16.msra.mxu0 %v1397
    %1896 = vmatprep.subr.bf16.mxu0 %v1405
    %1897 = vmatpush1.bf16.msra.mxu0 %v1404
    %1898 = vmatprep.subr.bf16.mxu0 %v1412
    %1899 = vmatpush1.bf16.msra.mxu0 %v1411
    %1900 = vmatprep.subr.bf16.mxu0 %v1419
    %1901 = vmatpush1.bf16.msra.mxu0 %v1418
    %1902 = vmatprep.subr.bf16.mxu0 %v1426
    %1903 = vmatpush1.bf16.msra.mxu0 %v1425
    %1904 = vmatprep.subr.bf16.mxu0 %v1433
    %1905 = vmatpush1.bf16.msra.mxu0 %v1432
    %1906 = vmatprep.subr.bf16.mxu0 %v1440
    %1907 = vmatpush1.bf16.msra.mxu0 %v1439
    %1908 = vmatprep.subr.bf16.mxu0 %v1447
    %1909 = vmatpush1.bf16.msra.mxu0 %v1446
    %1910 = vmatprep.mubr.bf16.mxu0 %v227
    %1911 = vmatmul.mubr.bf16.gmra.mrb[0].mxu0 %v226
    %v1912 = vpop.f32.mrb[0].mxu0
    %v1913 = vadd.f32 %v1872, %v1912
    %v1914 = vpop.f32.mrb[0].mxu0
    %v1915 = vadd.f32 %v1874, %v1914
    %v1916 = vpop.f32.mrb[0].mxu0
    %v1917 = vpop.f32.mrb[0].mxu0
    %1918 = vdwg.mxu0
    %1919 = vmatprep.subr.bf16.mxu0 0
    %1920 = vmatpush1.bf16.msra.mxu0 %v1231
    %1921 = vmatprep.subr.bf16.mxu0 0
    %1922 = vmatpush1.bf16.msra.mxu0 %v1238
    %1923 = vmatprep.subr.bf16.mxu0 0
    %1924 = vmatpush1.bf16.msra.mxu0 %v1245
    %1925 = vmatprep.subr.bf16.mxu0 0
    %1926 = vmatpush1.bf16.msra.mxu0 %v1252
    %1927 = vmatprep.subr.bf16.mxu0 0
    %1928 = vmatpush1.bf16.msra.mxu0 %v1259
    %1929 = vmatprep.subr.bf16.mxu0 0
    %1930 = vmatpush1.bf16.msra.mxu0 %v1266
    %1931 = vmatprep.subr.bf16.mxu0 0
    %1932 = vmatpush1.bf16.msra.mxu0 %v1273
    %1933 = vmatprep.subr.bf16.mxu0 0
    %1934 = vmatpush1.bf16.msra.mxu0 %v1280
    %1935 = vmatprep.subr.bf16.mxu0 0
    %1936 = vmatpush1.bf16.msra.mxu0 %v1287
    %1937 = vmatprep.subr.bf16.mxu0 0
    %1938 = vmatpush1.bf16.msra.mxu0 %v1294
    %1939 = vmatprep.subr.bf16.mxu0 0
    %1940 = vmatpush1.bf16.msra.mxu0 %v1301
    %1941 = vmatprep.subr.bf16.mxu0 0
    %1942 = vmatpush1.bf16.msra.mxu0 %v1308
    %1943 = vmatprep.subr.bf16.mxu0 0
    %1944 = vmatpush1.bf16.msra.mxu0 %v1315
    %1945 = vmatprep.subr.bf16.mxu0 0
    %1946 = vmatpush1.bf16.msra.mxu0 %v1322
    %1947 = vmatprep.subr.bf16.mxu0 0
    %1948 = vmatpush1.bf16.msra.mxu0 %v1329
    %1949 = vmatprep.subr.bf16.mxu0 0
    %1950 = vmatpush1.bf16.msra.mxu0 %v1336
    %1951 = vmatprep.mubr.bf16.mxu0 %v225
    %1952 = vmatmul.mubr.bf16.gmra.mrb[0].mxu0 %v224
    %v1953 = vpop.f32.mrb[0].mxu0
    %v1954 = vadd.f32 %v513, %v1953
    %v1955 = vpop.f32.mrb[0].mxu0
    %v1956 = vpop.f32.mrb[0].mxu0
    %v1957 = vpop.f32.mrb[0].mxu0
    %1958 = vdwg.mxu0
    %1959 = vmatprep.subr.bf16.mxu0 0
    %1960 = vmatpush1.bf16.msra.mxu0 %v1343
    %1961 = vmatprep.subr.bf16.mxu0 0
    %1962 = vmatpush1.bf16.msra.mxu0 %v1350
    %1963 = vmatprep.subr.bf16.mxu0 0
    %1964 = vmatpush1.bf16.msra.mxu0 %v1357
    %1965 = vmatprep.subr.bf16.mxu0 0
    %1966 = vmatpush1.bf16.msra.mxu0 %v1364
    %1967 = vmatprep.subr.bf16.mxu0 0
    %1968 = vmatpush1.bf16.msra.mxu0 %v1371
    %1969 = vmatprep.subr.bf16.mxu0 0
    %1970 = vmatpush1.bf16.msra.mxu0 %v1378
    %1971 = vmatprep.subr.bf16.mxu0 0
    %1972 = vmatpush1.bf16.msra.mxu0 %v1385
    %1973 = vmatprep.subr.bf16.mxu0 0
    %1974 = vmatpush1.bf16.msra.mxu0 %v1392
    %1975 = vmatprep.subr.bf16.mxu0 0
    %1976 = vmatpush1.bf16.msra.mxu0 %v1399
    %1977 = vmatprep.subr.bf16.mxu0 0
    %1978 = vmatpush1.bf16.msra.mxu0 %v1406
    %1979 = vmatprep.subr.bf16.mxu0 0
    %1980 = vmatpush1.bf16.msra.mxu0 %v1413
    %1981 = vmatprep.subr.bf16.mxu0 0
    %1982 = vmatpush1.bf16.msra.mxu0 %v1420
    %1983 = vmatprep.subr.bf16.mxu0 0
    %1984 = vmatpush1.bf16.msra.mxu0 %v1427
    %1985 = vmatprep.subr.bf16.mxu0 0
    %1986 = vmatpush1.bf16.msra.mxu0 %v1434
    %1987 = vmatprep.subr.bf16.mxu0 0
    %1988 = vmatpush1.bf16.msra.mxu0 %v1441
    %1989 = vmatprep.subr.bf16.mxu0 0
    %1990 = vmatpush1.bf16.msra.mxu0 %v1448
    %1991 = vmatprep.mubr.bf16.mxu0 %v227
    %1992 = vmatmul.mubr.bf16.gmra.mrb[0].mxu0 %v226
    %v1993 = vpop.f32.mrb[0].mxu0
    %v1994 = vadd.f32 %v1954, %v1993
    %v1995 = vpop.f32.mrb[0].mxu0
    %v1996 = vpop.f32.mrb[0].mxu0
    %v1997 = vpop.f32.mrb[0].mxu0
    %1998 = vdwg.mxu0
    %v1999 = vxor.u32 %v1749, 2147483648
    %v2000 = vxor.u32 %v1751, 2147483648
    %v2001 = vxor.u32 %v1831, 2147483648
    %v2002 = vxor.u32 %v1833, 2147483648
    %v2003 = vxor.u32 %v1913, 2147483648
    %v2004 = vxor.u32 %v1915, 2147483648
    %v2005 = vxor.u32 %v1994, 2147483648
    %v2006 = vmul.f32 %v1999, 1.442695
    %v2007 = vpow.pop %v2006
    %v2008 = vmul.f32 %v2000, 1.442695
    %v2009 = vpow.pop %v2008
    %v2010 = vmul.f32 %v2001, 1.442695
    %v2011 = vpow.pop %v2010
    %v2012 = vmul.f32 %v2002, 1.442695
    %v2013 = vpow.pop %v2012
    %v2014 = vmul.f32 %v2003, 1.442695
    %v2015 = vpow.pop %v2014
    %v2016 = vmul.f32 %v2004, 1.442695
    %v2017 = vpow.pop %v2016
    %v2018 = vmul.f32 %v2005, 1.442695
    %v2019 = vpow.pop %v2018
    %v2020 = vadd.f32 %v2007, 1.0
    %v2021 = vadd.f32 %v2009, 1.0
    %v2022 = vadd.f32 %v2011, 1.0
    %v2023 = vadd.f32 %v2013, 1.0
    %v2024 = vadd.f32 %v2015, 1.0
    %v2025 = vadd.f32 %v2017, 1.0
    %v2026 = vadd.f32 %v2019, 1.0
    %v2027 = vrcp.pop %v2020
    %v2028 = vmul.f32 1.0, %v2027
    %v2029 = vrcp.pop %v2021
    %v2030 = vmul.f32 1.0, %v2029
    %v2031 = vrcp.pop %v2022
    %v2032 = vmul.f32 1.0, %v2031
    %v2033 = vrcp.pop %v2023
    %v2034 = vmul.f32 1.0, %v2033
    %v2035 = vrcp.pop %v2024
    %v2036 = vmul.f32 1.0, %v2035
    %v2037 = vrcp.pop %v2025
    %v2038 = vmul.f32 1.0, %v2037
    %v2039 = vrcp.pop %v2026
    %v2040 = vmul.f32 1.0, %v2039
    %2041 = vst [vmem:[#allocation8] sm:$0xff] %v2028
    %2042 = vst [vmem:[#allocation8 + $0x8] sm:$0xff] %v2030
    %2043 = vst [vmem:[#allocation8 + $0x10] sm:$0xff] %v2032
    %2044 = vst [vmem:[#allocation8 + $0x18] sm:$0xff] %v2034
    %2045 = vst [vmem:[#allocation8 + $0x20] sm:$0xff] %v2036
    %2046 = vst [vmem:[#allocation8 + $0x28] sm:$0xff] %v2038
    %2047 = vst [vmem:[#allocation8 + $0x30] sm:$0xff] %v2040
    // Predicated region
    $region34: #{tpu_custom_call.1} parent=1 // pred_check
      _
    $region35: #{tpu_custom_call.1} parent=1 // pred_check_branch
      %2049 = sbr.rel (0) target = $region37
    $region36: #{tpu_custom_call.1} parent=1 // pred_region
      %s2051 = ssub.s32 896, 896
      %2052 = vsyncadd [#allocation4], %s2051
      %s2054 = sshll.u32 [#allocation8], 4
      %s2055 = int_to_ptr.vmem [resolvable:$true] %s2054
      %2057 = dma.vmem_to_hbm [thread:$0]  %s2055, 896, %s5, [#allocation4]
    $region37: #{tpu_custom_call.1} parent=1 // pred_fallthru
      _
    // Predicated region
    $region38: #{tpu_custom_call.1} parent=1 // pred_check
      _
    $region39: #{tpu_custom_call.1} parent=1 // pred_check_branch
      %2059 = sbr.rel (0) target = $region41
    $region40: #{tpu_custom_call.1} parent=1 // pred_region
      %2060 = dma.done [#allocation4], 896
    $region41: #{tpu_custom_call.1} parent=1 // pred_fallthru
      _
    %2061 = vsyncpa [#allocation3], 1
    %2062 = vsyncpa [#allocation6], 1
    %2063 = vsyncpa [#allocation4], 1

</llo_original>
